<compile_context>
chip_gen: v6e
topology: v6e:2x2x1
jax: 0.10.0
libtpu: 0.0.40
codegen_flags: <defaults>
</compile_context>

<pallas_src>
import functools

import jax
import jax.numpy as jnp
from jax.experimental import pallas as pl
from jax.experimental.pallas import tpu as pltpu


# ----------------------------------------------------------------------------
# Fused whole-network kernel (one grid step per batch element).
# ----------------------------------------------------------------------------
def _m5_kernel(x_ref, w1_ref, b1_ref, w2_ref, b2_ref, w3_ref, b3_ref,
               w4_ref, b4_ref, fcw_ref, fcb_ref, o_ref, *, cfg):
    stride, pool, cin, lp1 = cfg["stride"], cfg["pool"], cfg["cin"], cfg["lp1"]
    k1, k2, k3, k4 = cfg["ks"]
    step = stride * pool

    # ------------------------------------------------------------------
    # Stage 1: conv1(stride) + folded-BN + ReLU + MaxPool(pool), fully fused.
    # The wrapper phase-splits the waveform: xp[ci*step + s, u] = x[ci, step*u + s]
    #   pooled[c, j] = max_{r<pool} sum_{ci,k} w1[c, k*cin+ci]
    #                                  * x[ci, stride*(pool*j + r) + k]
    # with x[ci, step*j + q] = xs[q//step][ci*step + q%step, j], q = stride*r+k.
    # ------------------------------------------------------------------
    xp = x_ref[0]                              # (cin*step, L//step) lane-dense
    w1 = w1_ref[...]                           # (C1, k1*cin)
    c1 = w1.shape[0]
    d_max = (stride * (pool - 1) + k1 - 1) // step
    xs = [xp[:, d:d + lp1] for d in range(d_max + 1)]      # shifted copies

    pooled = None
    for r in range(pool):                      # static unroll: pool*k1*cin MACs
        acc = jnp.zeros((c1, lp1), jnp.float32)
        for k in range(k1):
            q = stride * r + k
            d, s = q // step, q % step
            for ci in range(cin):
                col = k * cin + ci
                row = ci * step + s
                acc = acc + w1[:, col:col + 1] * xs[d][row:row + 1, :]
        pooled = acc if pooled is None else jnp.maximum(pooled, acc)
    # relu(. + bias) is monotonic, so it commutes with the max-pool.
    p = jnp.maximum(pooled + b1_ref[...], 0.0)             # (C1, lp1)

    # ------------------------------------------------------------------
    # Later stages: stride-1 conv as one small MXU matmul on stacked shifted
    # slices, + folded-BN + ReLU, then MaxPool(pool).
    # ------------------------------------------------------------------
    def conv_bn_relu(prev, kk, w_ref, b_ref):
        lo = prev.shape[1] - kk + 1
        pat = jnp.concatenate([prev[:, k:k + lo] for k in range(kk)], axis=0)
        y = jnp.dot(w_ref[...], pat, preferred_element_type=jnp.float32)
        return jnp.maximum(y + b_ref[...], 0.0)            # (Cout, lo)

    def maxpool(a):
        lo = a.shape[1]
        lp, t = lo // pool, lo - (pool - 1)
        m = a[:, :t]
        for r in range(1, pool):                           # running 4-window max
            m = jnp.maximum(m, a[:, r:r + t])
        # stride-`pool` lane downsample as a matmul with a tiny 0/1 matrix.
        rows = jax.lax.broadcasted_iota(jnp.int32, (t, lp), 0)
        cols = jax.lax.broadcasted_iota(jnp.int32, (t, lp), 1)
        sel = (rows == pool * cols).astype(jnp.float32)
        return jnp.dot(m, sel, preferred_element_type=jnp.float32)   # (C, lp)

    for kk, w_r, b_r in ((k2, w2_ref, b2_ref),
                         (k3, w3_ref, b3_ref),
                         (k4, w4_ref, b4_ref)):
        p = maxpool(conv_bn_relu(p, kk, w_r, b_r))

    # ------------------------------------------------------------------
    # Head: global average over remaining length + Linear + log_softmax.
    # mean and Linear commute, so apply fc first, then mean over lanes.
    # ------------------------------------------------------------------
    t = jnp.dot(fcw_ref[...], p, preferred_element_type=jnp.float32)  # (n_out, Lf)
    logits = jnp.mean(t, axis=1, keepdims=True) + fcb_ref[...]        # (n_out, 1)
    z = logits - jnp.max(logits, axis=0, keepdims=True)
    lse = jnp.log(jnp.sum(jnp.exp(z), axis=0, keepdims=True))
    o_ref[0] = z - lse


# ----------------------------------------------------------------------------
# Wrapper: fold BN, phase-split the input, launch the fused kernel.
# ----------------------------------------------------------------------------
def m5_forward(x, params, *, stride, pool, kernel_sizes):
    """x: (B, n_input, L) float32 (PyTorch NCL).  Returns (B, 1, n_output)."""
    B, cin, L = x.shape
    k1, k2, k3, k4 = kernel_sizes
    step = stride * pool
    assert L % step == 0, "demo wrapper assumes L divisible by stride*pool"
    lo1 = (L - k1) // stride + 1
    lp1 = lo1 // pool
    d_max = (stride * (pool - 1) + k1 - 1) // step
    assert lp1 - 1 + d_max <= L // step - 1

    def fold(w, b, scale, shift):
        # Fold inference-mode BN into conv: y = relu(conv*scale + (b*scale+shift))
        cout, cin_, kk = w.shape
        wm = jnp.transpose(w, (0, 2, 1)).reshape(cout, kk * cin_)   # col = k*cin + ci
        return ((wm * scale[:, None]).astype(jnp.float32),
                ((b * scale + shift)[:, None]).astype(jnp.float32))

    w1f, b1f = fold(params["w1"], params["b1"], params["s1"], params["h1"])
    w2f, b2f = fold(params["w2"], params["b2"], params["s2"], params["h2"])
    w3f, b3f = fold(params["w3"], params["b3"], params["s3"], params["h3"])
    w4f, b4f = fold(params["w4"], params["b4"], params["s4"], params["h4"])
    fcw = params["fc_w"].astype(jnp.float32)                        # (n_out, C4)
    fcb = params["fc_b"].astype(jnp.float32)[:, None]               # (n_out, 1)
    n_out = fcw.shape[0]

    # Phase-split the waveform: x_ph[b, ci*step + s, u] = x[b, ci, step*u + s].
    x_ph = jnp.transpose(
        x.astype(jnp.float32).reshape(B, cin, L // step, step),
        (0, 1, 3, 2)).reshape(B, cin * step, L // step)

    cfg = dict(stride=stride, pool=pool, cin=cin, lp1=lp1, ks=(k1, k2, k3, k4))
    kernel = functools.partial(_m5_kernel, cfg=cfg)
    const = lambda a: pl.BlockSpec(a.shape, lambda b: (0, 0))

    out = pl.pallas_call(
        kernel,
        out_shape=jax.ShapeDtypeStruct((B, n_out, 1), jnp.float32),
        grid=(B,),
        in_specs=[
            pl.BlockSpec((1, cin * step, L // step), lambda b: (b, 0, 0)),
            const(w1f), const(b1f),
            const(w2f), const(b2f),
            const(w3f), const(b3f),
            const(w4f), const(b4f),
            const(fcw), const(fcb),
        ],
        out_specs=pl.BlockSpec((1, n_out, 1), lambda b: (b, 0, 0)),
        compiler_params=pltpu.CompilerParams(
            dimension_semantics=("parallel",)),
    )(x_ph, w1f, b1f, w2f, b2f, w3f, b3f, w4f, b4f, fcw, fcb)

    return jnp.transpose(out, (0, 2, 1))      # (B, 1, n_out), like PyTorch


# ----------------------------------------------------------------------------
# Pure-JAX reference (PyTorch semantics) for the correctness check.
# ----------------------------------------------------------------------------
def m5_reference(x, params, *, stride, pool, kernel_sizes):
    def stage(h, w, b, scale, shift, st):
        y = jax.lax.conv_general_dilated(
            h, w, window_strides=(st,), padding="VALID",
            dimension_numbers=("NCH", "OIH", "NCH"),
            precision=jax.lax.Precision.HIGHEST)
        y = (y + b[None, :, None]) * scale[None, :, None] + shift[None, :, None]
        y = jnp.maximum(y, 0.0)
        bsz, c, l = y.shape
        lp = l // pool
        return y[:, :, :lp * pool].reshape(bsz, c, lp, pool).max(axis=-1)

    h = stage(x, params["w1"], params["b1"], params["s1"], params["h1"], stride)
    h = stage(h, params["w2"], params["b2"], params["s2"], params["h2"], 1)
    h = stage(h, params["w3"], params["b3"], params["s3"], params["h3"], 1)
    h = stage(h, params["w4"], params["b4"], params["s4"], params["h4"], 1)
    feat = jnp.mean(h, axis=-1)                               # (B, C4)
    logits = feat @ params["fc_w"].T + params["fc_b"]         # (B, n_out)
    return jax.nn.log_softmax(logits, axis=-1)[:, None, :]    # (B, 1, n_out)


# ----------------------------------------------------------------------------
if __name__ == "__main__":
    # M5 hyper-parameters (consistent with the PyTorch constructor).
    n_input, n_output, stride, n_channel = 1, 10, 4, 8
    conv_kernel_sizes = (16, 3, 3, 3)
    pool = 4
    B, L = 2, 4096

    keys = iter(jax.random.split(jax.random.PRNGKey(0), 32))

    def init_conv(cout, cin, k):
        w = jax.random.normal(next(keys), (cout, cin, k), jnp.float32) / jnp.sqrt(cin * k)
        b = 0.1 * jax.random.normal(next(keys), (cout,), jnp.float32)
        return w, b

    def init_bn(c):
        gamma = 1.0 + 0.1 * jax.random.normal(next(keys), (c,), jnp.float32)
        beta = 0.1 * jax.random.normal(next(keys), (c,), jnp.float32)
        rmean = 0.1 * jax.random.normal(next(keys), (c,), jnp.float32)
        rvar = jnp.abs(1.0 + 0.1 * jax.random.normal(next(keys), (c,), jnp.float32))
        scale = gamma / jnp.sqrt(rvar + 1e-5)
        shift = beta - rmean * scale
        return scale, shift

    params = {}
    params["w1"], params["b1"] = init_conv(n_channel, n_input, conv_kernel_sizes[0])
    params["s1"], params["h1"] = init_bn(n_channel)
    params["w2"], params["b2"] = init_conv(n_channel, n_channel, conv_kernel_sizes[1])
    params["s2"], params["h2"] = init_bn(n_channel)
    params["w3"], params["b3"] = init_conv(2 * n_channel, n_channel, conv_kernel_sizes[2])
    params["s3"], params["h3"] = init_bn(2 * n_channel)
    params["w4"], params["b4"] = init_conv(2 * n_channel, 2 * n_channel, conv_kernel_sizes[3])
    params["s4"], params["h4"] = init_bn(2 * n_channel)
    params["fc_w"] = (jax.random.normal(next(keys), (n_output, 2 * n_channel), jnp.float32)
                      / jnp.sqrt(2 * n_channel))
    params["fc_b"] = 0.1 * jax.random.normal(next(keys), (n_output,), jnp.float32)

    x = jax.random.normal(next(keys), (B, n_input, L), jnp.float32)

    @jax.jit
    def fwd(x, params):
        return m5_forward(x, params, stride=stride, pool=pool,
                          kernel_sizes=conv_kernel_sizes)

    out = fwd(x, params)
    jax.block_until_ready(out)

    ref = m5_reference(x, params, stride=stride, pool=pool,
                       kernel_sizes=conv_kernel_sizes)
    assert out.shape == (B, 1, n_output), out.shape
    max_err = float(jnp.max(jnp.abs(out - ref)))
    assert jnp.allclose(out, ref, rtol=3e-2, atol=3e-2), max_err
    print("KERNEL_OK")
</pallas_src>

<mosaic_0001>
module attributes {stable_mosaic.version = 11 : i64} {
  func.func @_m5_kernel(%arg0: i32, %arg1: memref<1x16x256xf32, #tpu.memory_space<vmem>>, %arg2: memref<8x16xf32, #tpu.memory_space<vmem>>, %arg3: memref<8x1xf32, #tpu.memory_space<vmem>>, %arg4: memref<8x24xf32, #tpu.memory_space<vmem>>, %arg5: memref<8x1xf32, #tpu.memory_space<vmem>>, %arg6: memref<16x24xf32, #tpu.memory_space<vmem>>, %arg7: memref<16x1xf32, #tpu.memory_space<vmem>>, %arg8: memref<16x48xf32, #tpu.memory_space<vmem>>, %arg9: memref<16x1xf32, #tpu.memory_space<vmem>>, %arg10: memref<10x16xf32, #tpu.memory_space<vmem>>, %arg11: memref<10x1xf32, #tpu.memory_space<vmem>>, %arg12: memref<1x10x1xf32, #tpu.memory_space<vmem>>) attributes {dimension_semantics = [#tpu.dimension_semantics<parallel>], iteration_bounds = array<i64: 2>, scalar_prefetch = 0 : i64, scratch_operands = 0 : i64, tpu.core_type = #tpu.core_type<tc>, window_params = [{transform_indices = @transform_0, window_bounds = array<i64: 1, 16, 256>}, {pipeline_mode = #tpu.pipeline_mode<synchronous>, transform_indices = @transform_1, window_bounds = array<i64: 8, 16>}, {pipeline_mode = #tpu.pipeline_mode<synchronous>, transform_indices = @transform_2, window_bounds = array<i64: 8, 1>}, {pipeline_mode = #tpu.pipeline_mode<synchronous>, transform_indices = @transform_3, window_bounds = array<i64: 8, 24>}, {pipeline_mode = #tpu.pipeline_mode<synchronous>, transform_indices = @transform_4, window_bounds = array<i64: 8, 1>}, {pipeline_mode = #tpu.pipeline_mode<synchronous>, transform_indices = @transform_5, window_bounds = array<i64: 16, 24>}, {pipeline_mode = #tpu.pipeline_mode<synchronous>, transform_indices = @transform_6, window_bounds = array<i64: 16, 1>}, {pipeline_mode = #tpu.pipeline_mode<synchronous>, transform_indices = @transform_7, window_bounds = array<i64: 16, 48>}, {pipeline_mode = #tpu.pipeline_mode<synchronous>, transform_indices = @transform_8, window_bounds = array<i64: 16, 1>}, {pipeline_mode = #tpu.pipeline_mode<synchronous>, transform_indices = @transform_9, window_bounds = array<i64: 10, 16>}, {pipeline_mode = #tpu.pipeline_mode<synchronous>, transform_indices = @transform_10, window_bounds = array<i64: 10, 1>}, {transform_indices = @transform_11, window_bounds = array<i64: 1, 10, 1>}]} {
    %c0 = arith.constant 0 : index
    %c0_0 = arith.constant 0 : index
    %c0_1 = arith.constant 0 : index
    %0 = vector.load %arg1[%c0, %c0_0, %c0_1] : memref<1x16x256xf32, #tpu.memory_space<vmem>>, vector<1x16x256xf32>
    %1 = vector.shape_cast %0 : vector<1x16x256xf32> to vector<16x256xf32>
    %c0_2 = arith.constant 0 : index
    %c0_3 = arith.constant 0 : index
    %2 = vector.load %arg2[%c0_2, %c0_3] : memref<8x16xf32, #tpu.memory_space<vmem>>, vector<8x16xf32>
    %3 = vector.extract_strided_slice %1 {offsets = [0, 0], sizes = [16, 255], strides = [1, 1]} : vector<16x256xf32> to vector<16x255xf32>
    %4 = vector.extract_strided_slice %1 {offsets = [0, 1], sizes = [16, 255], strides = [1, 1]} : vector<16x256xf32> to vector<16x255xf32>
    %cst = arith.constant 0.000000e+00 : f32
    %5 = vector.broadcast %cst : f32 to vector<8x255xf32>
    %6 = vector.extract_strided_slice %2 {offsets = [0, 0], sizes = [8, 1], strides = [1, 1]} : vector<8x16xf32> to vector<8x1xf32>
    %7 = vector.extract_strided_slice %3 {offsets = [0, 0], sizes = [1, 255], strides = [1, 1]} : vector<16x255xf32> to vector<1x255xf32>
    %8 = vector.broadcast %6 : vector<8x1xf32> to vector<8x255xf32>
    %9 = vector.broadcast %7 : vector<1x255xf32> to vector<8x255xf32>
    %10 = arith.mulf %8, %9 : vector<8x255xf32>
    %11 = arith.addf %5, %10 : vector<8x255xf32>
    %12 = vector.extract_strided_slice %2 {offsets = [0, 1], sizes = [8, 1], strides = [1, 1]} : vector<8x16xf32> to vector<8x1xf32>
    %13 = vector.extract_strided_slice %3 {offsets = [1, 0], sizes = [1, 255], strides = [1, 1]} : vector<16x255xf32> to vector<1x255xf32>
    %14 = vector.broadcast %12 : vector<8x1xf32> to vector<8x255xf32>
    %15 = vector.broadcast %13 : vector<1x255xf32> to vector<8x255xf32>
    %16 = arith.mulf %14, %15 : vector<8x255xf32>
    %17 = arith.addf %11, %16 : vector<8x255xf32>
    %18 = vector.extract_strided_slice %2 {offsets = [0, 2], sizes = [8, 1], strides = [1, 1]} : vector<8x16xf32> to vector<8x1xf32>
    %19 = vector.extract_strided_slice %3 {offsets = [2, 0], sizes = [1, 255], strides = [1, 1]} : vector<16x255xf32> to vector<1x255xf32>
    %20 = vector.broadcast %18 : vector<8x1xf32> to vector<8x255xf32>
    %21 = vector.broadcast %19 : vector<1x255xf32> to vector<8x255xf32>
    %22 = arith.mulf %20, %21 : vector<8x255xf32>
    %23 = arith.addf %17, %22 : vector<8x255xf32>
    %24 = vector.extract_strided_slice %2 {offsets = [0, 3], sizes = [8, 1], strides = [1, 1]} : vector<8x16xf32> to vector<8x1xf32>
    %25 = vector.extract_strided_slice %3 {offsets = [3, 0], sizes = [1, 255], strides = [1, 1]} : vector<16x255xf32> to vector<1x255xf32>
    %26 = vector.broadcast %24 : vector<8x1xf32> to vector<8x255xf32>
    %27 = vector.broadcast %25 : vector<1x255xf32> to vector<8x255xf32>
    %28 = arith.mulf %26, %27 : vector<8x255xf32>
    %29 = arith.addf %23, %28 : vector<8x255xf32>
    %30 = vector.extract_strided_slice %2 {offsets = [0, 4], sizes = [8, 1], strides = [1, 1]} : vector<8x16xf32> to vector<8x1xf32>
    %31 = vector.extract_strided_slice %3 {offsets = [4, 0], sizes = [1, 255], strides = [1, 1]} : vector<16x255xf32> to vector<1x255xf32>
    %32 = vector.broadcast %30 : vector<8x1xf32> to vector<8x255xf32>
    %33 = vector.broadcast %31 : vector<1x255xf32> to vector<8x255xf32>
    %34 = arith.mulf %32, %33 : vector<8x255xf32>
    %35 = arith.addf %29, %34 : vector<8x255xf32>
    %36 = vector.extract_strided_slice %2 {offsets = [0, 5], sizes = [8, 1], strides = [1, 1]} : vector<8x16xf32> to vector<8x1xf32>
    %37 = vector.extract_strided_slice %3 {offsets = [5, 0], sizes = [1, 255], strides = [1, 1]} : vector<16x255xf32> to vector<1x255xf32>
    %38 = vector.broadcast %36 : vector<8x1xf32> to vector<8x255xf32>
    %39 = vector.broadcast %37 : vector<1x255xf32> to vector<8x255xf32>
    %40 = arith.mulf %38, %39 : vector<8x255xf32>
    %41 = arith.addf %35, %40 : vector<8x255xf32>
    %42 = vector.extract_strided_slice %2 {offsets = [0, 6], sizes = [8, 1], strides = [1, 1]} : vector<8x16xf32> to vector<8x1xf32>
    %43 = vector.extract_strided_slice %3 {offsets = [6, 0], sizes = [1, 255], strides = [1, 1]} : vector<16x255xf32> to vector<1x255xf32>
    %44 = vector.broadcast %42 : vector<8x1xf32> to vector<8x255xf32>
    %45 = vector.broadcast %43 : vector<1x255xf32> to vector<8x255xf32>
    %46 = arith.mulf %44, %45 : vector<8x255xf32>
    %47 = arith.addf %41, %46 : vector<8x255xf32>
    %48 = vector.extract_strided_slice %2 {offsets = [0, 7], sizes = [8, 1], strides = [1, 1]} : vector<8x16xf32> to vector<8x1xf32>
    %49 = vector.extract_strided_slice %3 {offsets = [7, 0], sizes = [1, 255], strides = [1, 1]} : vector<16x255xf32> to vector<1x255xf32>
    %50 = vector.broadcast %48 : vector<8x1xf32> to vector<8x255xf32>
    %51 = vector.broadcast %49 : vector<1x255xf32> to vector<8x255xf32>
    %52 = arith.mulf %50, %51 : vector<8x255xf32>
    %53 = arith.addf %47, %52 : vector<8x255xf32>
    %54 = vector.extract_strided_slice %2 {offsets = [0, 8], sizes = [8, 1], strides = [1, 1]} : vector<8x16xf32> to vector<8x1xf32>
    %55 = vector.extract_strided_slice %3 {offsets = [8, 0], sizes = [1, 255], strides = [1, 1]} : vector<16x255xf32> to vector<1x255xf32>
    %56 = vector.broadcast %54 : vector<8x1xf32> to vector<8x255xf32>
    %57 = vector.broadcast %55 : vector<1x255xf32> to vector<8x255xf32>
    %58 = arith.mulf %56, %57 : vector<8x255xf32>
    %59 = arith.addf %53, %58 : vector<8x255xf32>
    %60 = vector.extract_strided_slice %2 {offsets = [0, 9], sizes = [8, 1], strides = [1, 1]} : vector<8x16xf32> to vector<8x1xf32>
    %61 = vector.extract_strided_slice %3 {offsets = [9, 0], sizes = [1, 255], strides = [1, 1]} : vector<16x255xf32> to vector<1x255xf32>
    %62 = vector.broadcast %60 : vector<8x1xf32> to vector<8x255xf32>
    %63 = vector.broadcast %61 : vector<1x255xf32> to vector<8x255xf32>
    %64 = arith.mulf %62, %63 : vector<8x255xf32>
    %65 = arith.addf %59, %64 : vector<8x255xf32>
    %66 = vector.extract_strided_slice %2 {offsets = [0, 10], sizes = [8, 1], strides = [1, 1]} : vector<8x16xf32> to vector<8x1xf32>
    %67 = vector.extract_strided_slice %3 {offsets = [10, 0], sizes = [1, 255], strides = [1, 1]} : vector<16x255xf32> to vector<1x255xf32>
    %68 = vector.broadcast %66 : vector<8x1xf32> to vector<8x255xf32>
    %69 = vector.broadcast %67 : vector<1x255xf32> to vector<8x255xf32>
    %70 = arith.mulf %68, %69 : vector<8x255xf32>
    %71 = arith.addf %65, %70 : vector<8x255xf32>
    %72 = vector.extract_strided_slice %2 {offsets = [0, 11], sizes = [8, 1], strides = [1, 1]} : vector<8x16xf32> to vector<8x1xf32>
    %73 = vector.extract_strided_slice %3 {offsets = [11, 0], sizes = [1, 255], strides = [1, 1]} : vector<16x255xf32> to vector<1x255xf32>
    %74 = vector.broadcast %72 : vector<8x1xf32> to vector<8x255xf32>
    %75 = vector.broadcast %73 : vector<1x255xf32> to vector<8x255xf32>
    %76 = arith.mulf %74, %75 : vector<8x255xf32>
    %77 = arith.addf %71, %76 : vector<8x255xf32>
    %78 = vector.extract_strided_slice %2 {offsets = [0, 12], sizes = [8, 1], strides = [1, 1]} : vector<8x16xf32> to vector<8x1xf32>
    %79 = vector.extract_strided_slice %3 {offsets = [12, 0], sizes = [1, 255], strides = [1, 1]} : vector<16x255xf32> to vector<1x255xf32>
    %80 = vector.broadcast %78 : vector<8x1xf32> to vector<8x255xf32>
    %81 = vector.broadcast %79 : vector<1x255xf32> to vector<8x255xf32>
    %82 = arith.mulf %80, %81 : vector<8x255xf32>
    %83 = arith.addf %77, %82 : vector<8x255xf32>
    %84 = vector.extract_strided_slice %2 {offsets = [0, 13], sizes = [8, 1], strides = [1, 1]} : vector<8x16xf32> to vector<8x1xf32>
    %85 = vector.extract_strided_slice %3 {offsets = [13, 0], sizes = [1, 255], strides = [1, 1]} : vector<16x255xf32> to vector<1x255xf32>
    %86 = vector.broadcast %84 : vector<8x1xf32> to vector<8x255xf32>
    %87 = vector.broadcast %85 : vector<1x255xf32> to vector<8x255xf32>
    %88 = arith.mulf %86, %87 : vector<8x255xf32>
    %89 = arith.addf %83, %88 : vector<8x255xf32>
    %90 = vector.extract_strided_slice %2 {offsets = [0, 14], sizes = [8, 1], strides = [1, 1]} : vector<8x16xf32> to vector<8x1xf32>
    %91 = vector.extract_strided_slice %3 {offsets = [14, 0], sizes = [1, 255], strides = [1, 1]} : vector<16x255xf32> to vector<1x255xf32>
    %92 = vector.broadcast %90 : vector<8x1xf32> to vector<8x255xf32>
    %93 = vector.broadcast %91 : vector<1x255xf32> to vector<8x255xf32>
    %94 = arith.mulf %92, %93 : vector<8x255xf32>
    %95 = arith.addf %89, %94 : vector<8x255xf32>
    %96 = vector.extract_strided_slice %2 {offsets = [0, 15], sizes = [8, 1], strides = [1, 1]} : vector<8x16xf32> to vector<8x1xf32>
    %97 = vector.extract_strided_slice %3 {offsets = [15, 0], sizes = [1, 255], strides = [1, 1]} : vector<16x255xf32> to vector<1x255xf32>
    %98 = vector.broadcast %96 : vector<8x1xf32> to vector<8x255xf32>
    %99 = vector.broadcast %97 : vector<1x255xf32> to vector<8x255xf32>
    %100 = arith.mulf %98, %99 : vector<8x255xf32>
    %101 = arith.addf %95, %100 : vector<8x255xf32>
    %cst_4 = arith.constant 0.000000e+00 : f32
    %102 = vector.broadcast %cst_4 : f32 to vector<8x255xf32>
    %103 = vector.extract_strided_slice %2 {offsets = [0, 0], sizes = [8, 1], strides = [1, 1]} : vector<8x16xf32> to vector<8x1xf32>
    %104 = vector.extract_strided_slice %3 {offsets = [4, 0], sizes = [1, 255], strides = [1, 1]} : vector<16x255xf32> to vector<1x255xf32>
    %105 = vector.broadcast %103 : vector<8x1xf32> to vector<8x255xf32>
    %106 = vector.broadcast %104 : vector<1x255xf32> to vector<8x255xf32>
    %107 = arith.mulf %105, %106 : vector<8x255xf32>
    %108 = arith.addf %102, %107 : vector<8x255xf32>
    %109 = vector.extract_strided_slice %2 {offsets = [0, 1], sizes = [8, 1], strides = [1, 1]} : vector<8x16xf32> to vector<8x1xf32>
    %110 = vector.extract_strided_slice %3 {offsets = [5, 0], sizes = [1, 255], strides = [1, 1]} : vector<16x255xf32> to vector<1x255xf32>
    %111 = vector.broadcast %109 : vector<8x1xf32> to vector<8x255xf32>
    %112 = vector.broadcast %110 : vector<1x255xf32> to vector<8x255xf32>
    %113 = arith.mulf %111, %112 : vector<8x255xf32>
    %114 = arith.addf %108, %113 : vector<8x255xf32>
    %115 = vector.extract_strided_slice %2 {offsets = [0, 2], sizes = [8, 1], strides = [1, 1]} : vector<8x16xf32> to vector<8x1xf32>
    %116 = vector.extract_strided_slice %3 {offsets = [6, 0], sizes = [1, 255], strides = [1, 1]} : vector<16x255xf32> to vector<1x255xf32>
    %117 = vector.broadcast %115 : vector<8x1xf32> to vector<8x255xf32>
    %118 = vector.broadcast %116 : vector<1x255xf32> to vector<8x255xf32>
    %119 = arith.mulf %117, %118 : vector<8x255xf32>
    %120 = arith.addf %114, %119 : vector<8x255xf32>
    %121 = vector.extract_strided_slice %2 {offsets = [0, 3], sizes = [8, 1], strides = [1, 1]} : vector<8x16xf32> to vector<8x1xf32>
    %122 = vector.extract_strided_slice %3 {offsets = [7, 0], sizes = [1, 255], strides = [1, 1]} : vector<16x255xf32> to vector<1x255xf32>
    %123 = vector.broadcast %121 : vector<8x1xf32> to vector<8x255xf32>
    %124 = vector.broadcast %122 : vector<1x255xf32> to vector<8x255xf32>
    %125 = arith.mulf %123, %124 : vector<8x255xf32>
    %126 = arith.addf %120, %125 : vector<8x255xf32>
    %127 = vector.extract_strided_slice %2 {offsets = [0, 4], sizes = [8, 1], strides = [1, 1]} : vector<8x16xf32> to vector<8x1xf32>
    %128 = vector.extract_strided_slice %3 {offsets = [8, 0], sizes = [1, 255], strides = [1, 1]} : vector<16x255xf32> to vector<1x255xf32>
    %129 = vector.broadcast %127 : vector<8x1xf32> to vector<8x255xf32>
    %130 = vector.broadcast %128 : vector<1x255xf32> to vector<8x255xf32>
    %131 = arith.mulf %129, %130 : vector<8x255xf32>
    %132 = arith.addf %126, %131 : vector<8x255xf32>
    %133 = vector.extract_strided_slice %2 {offsets = [0, 5], sizes = [8, 1], strides = [1, 1]} : vector<8x16xf32> to vector<8x1xf32>
    %134 = vector.extract_strided_slice %3 {offsets = [9, 0], sizes = [1, 255], strides = [1, 1]} : vector<16x255xf32> to vector<1x255xf32>
    %135 = vector.broadcast %133 : vector<8x1xf32> to vector<8x255xf32>
    %136 = vector.broadcast %134 : vector<1x255xf32> to vector<8x255xf32>
    %137 = arith.mulf %135, %136 : vector<8x255xf32>
    %138 = arith.addf %132, %137 : vector<8x255xf32>
    %139 = vector.extract_strided_slice %2 {offsets = [0, 6], sizes = [8, 1], strides = [1, 1]} : vector<8x16xf32> to vector<8x1xf32>
    %140 = vector.extract_strided_slice %3 {offsets = [10, 0], sizes = [1, 255], strides = [1, 1]} : vector<16x255xf32> to vector<1x255xf32>
    %141 = vector.broadcast %139 : vector<8x1xf32> to vector<8x255xf32>
    %142 = vector.broadcast %140 : vector<1x255xf32> to vector<8x255xf32>
    %143 = arith.mulf %141, %142 : vector<8x255xf32>
    %144 = arith.addf %138, %143 : vector<8x255xf32>
    %145 = vector.extract_strided_slice %2 {offsets = [0, 7], sizes = [8, 1], strides = [1, 1]} : vector<8x16xf32> to vector<8x1xf32>
    %146 = vector.extract_strided_slice %3 {offsets = [11, 0], sizes = [1, 255], strides = [1, 1]} : vector<16x255xf32> to vector<1x255xf32>
    %147 = vector.broadcast %145 : vector<8x1xf32> to vector<8x255xf32>
    %148 = vector.broadcast %146 : vector<1x255xf32> to vector<8x255xf32>
    %149 = arith.mulf %147, %148 : vector<8x255xf32>
    %150 = arith.addf %144, %149 : vector<8x255xf32>
    %151 = vector.extract_strided_slice %2 {offsets = [0, 8], sizes = [8, 1], strides = [1, 1]} : vector<8x16xf32> to vector<8x1xf32>
    %152 = vector.extract_strided_slice %3 {offsets = [12, 0], sizes = [1, 255], strides = [1, 1]} : vector<16x255xf32> to vector<1x255xf32>
    %153 = vector.broadcast %151 : vector<8x1xf32> to vector<8x255xf32>
    %154 = vector.broadcast %152 : vector<1x255xf32> to vector<8x255xf32>
    %155 = arith.mulf %153, %154 : vector<8x255xf32>
    %156 = arith.addf %150, %155 : vector<8x255xf32>
    %157 = vector.extract_strided_slice %2 {offsets = [0, 9], sizes = [8, 1], strides = [1, 1]} : vector<8x16xf32> to vector<8x1xf32>
    %158 = vector.extract_strided_slice %3 {offsets = [13, 0], sizes = [1, 255], strides = [1, 1]} : vector<16x255xf32> to vector<1x255xf32>
    %159 = vector.broadcast %157 : vector<8x1xf32> to vector<8x255xf32>
    %160 = vector.broadcast %158 : vector<1x255xf32> to vector<8x255xf32>
    %161 = arith.mulf %159, %160 : vector<8x255xf32>
    %162 = arith.addf %156, %161 : vector<8x255xf32>
    %163 = vector.extract_strided_slice %2 {offsets = [0, 10], sizes = [8, 1], strides = [1, 1]} : vector<8x16xf32> to vector<8x1xf32>
    %164 = vector.extract_strided_slice %3 {offsets = [14, 0], sizes = [1, 255], strides = [1, 1]} : vector<16x255xf32> to vector<1x255xf32>
    %165 = vector.broadcast %163 : vector<8x1xf32> to vector<8x255xf32>
    %166 = vector.broadcast %164 : vector<1x255xf32> to vector<8x255xf32>
    %167 = arith.mulf %165, %166 : vector<8x255xf32>
    %168 = arith.addf %162, %167 : vector<8x255xf32>
    %169 = vector.extract_strided_slice %2 {offsets = [0, 11], sizes = [8, 1], strides = [1, 1]} : vector<8x16xf32> to vector<8x1xf32>
    %170 = vector.extract_strided_slice %3 {offsets = [15, 0], sizes = [1, 255], strides = [1, 1]} : vector<16x255xf32> to vector<1x255xf32>
    %171 = vector.broadcast %169 : vector<8x1xf32> to vector<8x255xf32>
    %172 = vector.broadcast %170 : vector<1x255xf32> to vector<8x255xf32>
    %173 = arith.mulf %171, %172 : vector<8x255xf32>
    %174 = arith.addf %168, %173 : vector<8x255xf32>
    %175 = vector.extract_strided_slice %2 {offsets = [0, 12], sizes = [8, 1], strides = [1, 1]} : vector<8x16xf32> to vector<8x1xf32>
    %176 = vector.extract_strided_slice %4 {offsets = [0, 0], sizes = [1, 255], strides = [1, 1]} : vector<16x255xf32> to vector<1x255xf32>
    %177 = vector.broadcast %175 : vector<8x1xf32> to vector<8x255xf32>
    %178 = vector.broadcast %176 : vector<1x255xf32> to vector<8x255xf32>
    %179 = arith.mulf %177, %178 : vector<8x255xf32>
    %180 = arith.addf %174, %179 : vector<8x255xf32>
    %181 = vector.extract_strided_slice %2 {offsets = [0, 13], sizes = [8, 1], strides = [1, 1]} : vector<8x16xf32> to vector<8x1xf32>
    %182 = vector.extract_strided_slice %4 {offsets = [1, 0], sizes = [1, 255], strides = [1, 1]} : vector<16x255xf32> to vector<1x255xf32>
    %183 = vector.broadcast %181 : vector<8x1xf32> to vector<8x255xf32>
    %184 = vector.broadcast %182 : vector<1x255xf32> to vector<8x255xf32>
    %185 = arith.mulf %183, %184 : vector<8x255xf32>
    %186 = arith.addf %180, %185 : vector<8x255xf32>
    %187 = vector.extract_strided_slice %2 {offsets = [0, 14], sizes = [8, 1], strides = [1, 1]} : vector<8x16xf32> to vector<8x1xf32>
    %188 = vector.extract_strided_slice %4 {offsets = [2, 0], sizes = [1, 255], strides = [1, 1]} : vector<16x255xf32> to vector<1x255xf32>
    %189 = vector.broadcast %187 : vector<8x1xf32> to vector<8x255xf32>
    %190 = vector.broadcast %188 : vector<1x255xf32> to vector<8x255xf32>
    %191 = arith.mulf %189, %190 : vector<8x255xf32>
    %192 = arith.addf %186, %191 : vector<8x255xf32>
    %193 = vector.extract_strided_slice %2 {offsets = [0, 15], sizes = [8, 1], strides = [1, 1]} : vector<8x16xf32> to vector<8x1xf32>
    %194 = vector.extract_strided_slice %4 {offsets = [3, 0], sizes = [1, 255], strides = [1, 1]} : vector<16x255xf32> to vector<1x255xf32>
    %195 = vector.broadcast %193 : vector<8x1xf32> to vector<8x255xf32>
    %196 = vector.broadcast %194 : vector<1x255xf32> to vector<8x255xf32>
    %197 = arith.mulf %195, %196 : vector<8x255xf32>
    %198 = arith.addf %192, %197 : vector<8x255xf32>
    %199 = arith.maximumf %101, %198 : vector<8x255xf32>
    %cst_5 = arith.constant 0.000000e+00 : f32
    %200 = vector.broadcast %cst_5 : f32 to vector<8x255xf32>
    %201 = vector.extract_strided_slice %2 {offsets = [0, 0], sizes = [8, 1], strides = [1, 1]} : vector<8x16xf32> to vector<8x1xf32>
    %202 = vector.extract_strided_slice %3 {offsets = [8, 0], sizes = [1, 255], strides = [1, 1]} : vector<16x255xf32> to vector<1x255xf32>
    %203 = vector.broadcast %201 : vector<8x1xf32> to vector<8x255xf32>
    %204 = vector.broadcast %202 : vector<1x255xf32> to vector<8x255xf32>
    %205 = arith.mulf %203, %204 : vector<8x255xf32>
    %206 = arith.addf %200, %205 : vector<8x255xf32>
    %207 = vector.extract_strided_slice %2 {offsets = [0, 1], sizes = [8, 1], strides = [1, 1]} : vector<8x16xf32> to vector<8x1xf32>
    %208 = vector.extract_strided_slice %3 {offsets = [9, 0], sizes = [1, 255], strides = [1, 1]} : vector<16x255xf32> to vector<1x255xf32>
    %209 = vector.broadcast %207 : vector<8x1xf32> to vector<8x255xf32>
    %210 = vector.broadcast %208 : vector<1x255xf32> to vector<8x255xf32>
    %211 = arith.mulf %209, %210 : vector<8x255xf32>
    %212 = arith.addf %206, %211 : vector<8x255xf32>
    %213 = vector.extract_strided_slice %2 {offsets = [0, 2], sizes = [8, 1], strides = [1, 1]} : vector<8x16xf32> to vector<8x1xf32>
    %214 = vector.extract_strided_slice %3 {offsets = [10, 0], sizes = [1, 255], strides = [1, 1]} : vector<16x255xf32> to vector<1x255xf32>
    %215 = vector.broadcast %213 : vector<8x1xf32> to vector<8x255xf32>
    %216 = vector.broadcast %214 : vector<1x255xf32> to vector<8x255xf32>
    %217 = arith.mulf %215, %216 : vector<8x255xf32>
    %218 = arith.addf %212, %217 : vector<8x255xf32>
    %219 = vector.extract_strided_slice %2 {offsets = [0, 3], sizes = [8, 1], strides = [1, 1]} : vector<8x16xf32> to vector<8x1xf32>
    %220 = vector.extract_strided_slice %3 {offsets = [11, 0], sizes = [1, 255], strides = [1, 1]} : vector<16x255xf32> to vector<1x255xf32>
    %221 = vector.broadcast %219 : vector<8x1xf32> to vector<8x255xf32>
    %222 = vector.broadcast %220 : vector<1x255xf32> to vector<8x255xf32>
    %223 = arith.mulf %221, %222 : vector<8x255xf32>
    %224 = arith.addf %218, %223 : vector<8x255xf32>
    %225 = vector.extract_strided_slice %2 {offsets = [0, 4], sizes = [8, 1], strides = [1, 1]} : vector<8x16xf32> to vector<8x1xf32>
    %226 = vector.extract_strided_slice %3 {offsets = [12, 0], sizes = [1, 255], strides = [1, 1]} : vector<16x255xf32> to vector<1x255xf32>
    %227 = vector.broadcast %225 : vector<8x1xf32> to vector<8x255xf32>
    %228 = vector.broadcast %226 : vector<1x255xf32> to vector<8x255xf32>
    %229 = arith.mulf %227, %228 : vector<8x255xf32>
    %230 = arith.addf %224, %229 : vector<8x255xf32>
    %231 = vector.extract_strided_slice %2 {offsets = [0, 5], sizes = [8, 1], strides = [1, 1]} : vector<8x16xf32> to vector<8x1xf32>
    %232 = vector.extract_strided_slice %3 {offsets = [13, 0], sizes = [1, 255], strides = [1, 1]} : vector<16x255xf32> to vector<1x255xf32>
    %233 = vector.broadcast %231 : vector<8x1xf32> to vector<8x255xf32>
    %234 = vector.broadcast %232 : vector<1x255xf32> to vector<8x255xf32>
    %235 = arith.mulf %233, %234 : vector<8x255xf32>
    %236 = arith.addf %230, %235 : vector<8x255xf32>
    %237 = vector.extract_strided_slice %2 {offsets = [0, 6], sizes = [8, 1], strides = [1, 1]} : vector<8x16xf32> to vector<8x1xf32>
    %238 = vector.extract_strided_slice %3 {offsets = [14, 0], sizes = [1, 255], strides = [1, 1]} : vector<16x255xf32> to vector<1x255xf32>
    %239 = vector.broadcast %237 : vector<8x1xf32> to vector<8x255xf32>
    %240 = vector.broadcast %238 : vector<1x255xf32> to vector<8x255xf32>
    %241 = arith.mulf %239, %240 : vector<8x255xf32>
    %242 = arith.addf %236, %241 : vector<8x255xf32>
    %243 = vector.extract_strided_slice %2 {offsets = [0, 7], sizes = [8, 1], strides = [1, 1]} : vector<8x16xf32> to vector<8x1xf32>
    %244 = vector.extract_strided_slice %3 {offsets = [15, 0], sizes = [1, 255], strides = [1, 1]} : vector<16x255xf32> to vector<1x255xf32>
    %245 = vector.broadcast %243 : vector<8x1xf32> to vector<8x255xf32>
    %246 = vector.broadcast %244 : vector<1x255xf32> to vector<8x255xf32>
    %247 = arith.mulf %245, %246 : vector<8x255xf32>
    %248 = arith.addf %242, %247 : vector<8x255xf32>
    %249 = vector.extract_strided_slice %2 {offsets = [0, 8], sizes = [8, 1], strides = [1, 1]} : vector<8x16xf32> to vector<8x1xf32>
    %250 = vector.extract_strided_slice %4 {offsets = [0, 0], sizes = [1, 255], strides = [1, 1]} : vector<16x255xf32> to vector<1x255xf32>
    %251 = vector.broadcast %249 : vector<8x1xf32> to vector<8x255xf32>
    %252 = vector.broadcast %250 : vector<1x255xf32> to vector<8x255xf32>
    %253 = arith.mulf %251, %252 : vector<8x255xf32>
    %254 = arith.addf %248, %253 : vector<8x255xf32>
    %255 = vector.extract_strided_slice %2 {offsets = [0, 9], sizes = [8, 1], strides = [1, 1]} : vector<8x16xf32> to vector<8x1xf32>
    %256 = vector.extract_strided_slice %4 {offsets = [1, 0], sizes = [1, 255], strides = [1, 1]} : vector<16x255xf32> to vector<1x255xf32>
    %257 = vector.broadcast %255 : vector<8x1xf32> to vector<8x255xf32>
    %258 = vector.broadcast %256 : vector<1x255xf32> to vector<8x255xf32>
    %259 = arith.mulf %257, %258 : vector<8x255xf32>
    %260 = arith.addf %254, %259 : vector<8x255xf32>
    %261 = vector.extract_strided_slice %2 {offsets = [0, 10], sizes = [8, 1], strides = [1, 1]} : vector<8x16xf32> to vector<8x1xf32>
    %262 = vector.extract_strided_slice %4 {offsets = [2, 0], sizes = [1, 255], strides = [1, 1]} : vector<16x255xf32> to vector<1x255xf32>
    %263 = vector.broadcast %261 : vector<8x1xf32> to vector<8x255xf32>
    %264 = vector.broadcast %262 : vector<1x255xf32> to vector<8x255xf32>
    %265 = arith.mulf %263, %264 : vector<8x255xf32>
    %266 = arith.addf %260, %265 : vector<8x255xf32>
    %267 = vector.extract_strided_slice %2 {offsets = [0, 11], sizes = [8, 1], strides = [1, 1]} : vector<8x16xf32> to vector<8x1xf32>
    %268 = vector.extract_strided_slice %4 {offsets = [3, 0], sizes = [1, 255], strides = [1, 1]} : vector<16x255xf32> to vector<1x255xf32>
    %269 = vector.broadcast %267 : vector<8x1xf32> to vector<8x255xf32>
    %270 = vector.broadcast %268 : vector<1x255xf32> to vector<8x255xf32>
    %271 = arith.mulf %269, %270 : vector<8x255xf32>
    %272 = arith.addf %266, %271 : vector<8x255xf32>
    %273 = vector.extract_strided_slice %2 {offsets = [0, 12], sizes = [8, 1], strides = [1, 1]} : vector<8x16xf32> to vector<8x1xf32>
    %274 = vector.extract_strided_slice %4 {offsets = [4, 0], sizes = [1, 255], strides = [1, 1]} : vector<16x255xf32> to vector<1x255xf32>
    %275 = vector.broadcast %273 : vector<8x1xf32> to vector<8x255xf32>
    %276 = vector.broadcast %274 : vector<1x255xf32> to vector<8x255xf32>
    %277 = arith.mulf %275, %276 : vector<8x255xf32>
    %278 = arith.addf %272, %277 : vector<8x255xf32>
    %279 = vector.extract_strided_slice %2 {offsets = [0, 13], sizes = [8, 1], strides = [1, 1]} : vector<8x16xf32> to vector<8x1xf32>
    %280 = vector.extract_strided_slice %4 {offsets = [5, 0], sizes = [1, 255], strides = [1, 1]} : vector<16x255xf32> to vector<1x255xf32>
    %281 = vector.broadcast %279 : vector<8x1xf32> to vector<8x255xf32>
    %282 = vector.broadcast %280 : vector<1x255xf32> to vector<8x255xf32>
    %283 = arith.mulf %281, %282 : vector<8x255xf32>
    %284 = arith.addf %278, %283 : vector<8x255xf32>
    %285 = vector.extract_strided_slice %2 {offsets = [0, 14], sizes = [8, 1], strides = [1, 1]} : vector<8x16xf32> to vector<8x1xf32>
    %286 = vector.extract_strided_slice %4 {offsets = [6, 0], sizes = [1, 255], strides = [1, 1]} : vector<16x255xf32> to vector<1x255xf32>
    %287 = vector.broadcast %285 : vector<8x1xf32> to vector<8x255xf32>
    %288 = vector.broadcast %286 : vector<1x255xf32> to vector<8x255xf32>
    %289 = arith.mulf %287, %288 : vector<8x255xf32>
    %290 = arith.addf %284, %289 : vector<8x255xf32>
    %291 = vector.extract_strided_slice %2 {offsets = [0, 15], sizes = [8, 1], strides = [1, 1]} : vector<8x16xf32> to vector<8x1xf32>
    %292 = vector.extract_strided_slice %4 {offsets = [7, 0], sizes = [1, 255], strides = [1, 1]} : vector<16x255xf32> to vector<1x255xf32>
    %293 = vector.broadcast %291 : vector<8x1xf32> to vector<8x255xf32>
    %294 = vector.broadcast %292 : vector<1x255xf32> to vector<8x255xf32>
    %295 = arith.mulf %293, %294 : vector<8x255xf32>
    %296 = arith.addf %290, %295 : vector<8x255xf32>
    %297 = arith.maximumf %199, %296 : vector<8x255xf32>
    %cst_6 = arith.constant 0.000000e+00 : f32
    %298 = vector.broadcast %cst_6 : f32 to vector<8x255xf32>
    %299 = vector.extract_strided_slice %2 {offsets = [0, 0], sizes = [8, 1], strides = [1, 1]} : vector<8x16xf32> to vector<8x1xf32>
    %300 = vector.extract_strided_slice %3 {offsets = [12, 0], sizes = [1, 255], strides = [1, 1]} : vector<16x255xf32> to vector<1x255xf32>
    %301 = vector.broadcast %299 : vector<8x1xf32> to vector<8x255xf32>
    %302 = vector.broadcast %300 : vector<1x255xf32> to vector<8x255xf32>
    %303 = arith.mulf %301, %302 : vector<8x255xf32>
    %304 = arith.addf %298, %303 : vector<8x255xf32>
    %305 = vector.extract_strided_slice %2 {offsets = [0, 1], sizes = [8, 1], strides = [1, 1]} : vector<8x16xf32> to vector<8x1xf32>
    %306 = vector.extract_strided_slice %3 {offsets = [13, 0], sizes = [1, 255], strides = [1, 1]} : vector<16x255xf32> to vector<1x255xf32>
    %307 = vector.broadcast %305 : vector<8x1xf32> to vector<8x255xf32>
    %308 = vector.broadcast %306 : vector<1x255xf32> to vector<8x255xf32>
    %309 = arith.mulf %307, %308 : vector<8x255xf32>
    %310 = arith.addf %304, %309 : vector<8x255xf32>
    %311 = vector.extract_strided_slice %2 {offsets = [0, 2], sizes = [8, 1], strides = [1, 1]} : vector<8x16xf32> to vector<8x1xf32>
    %312 = vector.extract_strided_slice %3 {offsets = [14, 0], sizes = [1, 255], strides = [1, 1]} : vector<16x255xf32> to vector<1x255xf32>
    %313 = vector.broadcast %311 : vector<8x1xf32> to vector<8x255xf32>
    %314 = vector.broadcast %312 : vector<1x255xf32> to vector<8x255xf32>
    %315 = arith.mulf %313, %314 : vector<8x255xf32>
    %316 = arith.addf %310, %315 : vector<8x255xf32>
    %317 = vector.extract_strided_slice %2 {offsets = [0, 3], sizes = [8, 1], strides = [1, 1]} : vector<8x16xf32> to vector<8x1xf32>
    %318 = vector.extract_strided_slice %3 {offsets = [15, 0], sizes = [1, 255], strides = [1, 1]} : vector<16x255xf32> to vector<1x255xf32>
    %319 = vector.broadcast %317 : vector<8x1xf32> to vector<8x255xf32>
    %320 = vector.broadcast %318 : vector<1x255xf32> to vector<8x255xf32>
    %321 = arith.mulf %319, %320 : vector<8x255xf32>
    %322 = arith.addf %316, %321 : vector<8x255xf32>
    %323 = vector.extract_strided_slice %2 {offsets = [0, 4], sizes = [8, 1], strides = [1, 1]} : vector<8x16xf32> to vector<8x1xf32>
    %324 = vector.extract_strided_slice %4 {offsets = [0, 0], sizes = [1, 255], strides = [1, 1]} : vector<16x255xf32> to vector<1x255xf32>
    %325 = vector.broadcast %323 : vector<8x1xf32> to vector<8x255xf32>
    %326 = vector.broadcast %324 : vector<1x255xf32> to vector<8x255xf32>
    %327 = arith.mulf %325, %326 : vector<8x255xf32>
    %328 = arith.addf %322, %327 : vector<8x255xf32>
    %329 = vector.extract_strided_slice %2 {offsets = [0, 5], sizes = [8, 1], strides = [1, 1]} : vector<8x16xf32> to vector<8x1xf32>
    %330 = vector.extract_strided_slice %4 {offsets = [1, 0], sizes = [1, 255], strides = [1, 1]} : vector<16x255xf32> to vector<1x255xf32>
    %331 = vector.broadcast %329 : vector<8x1xf32> to vector<8x255xf32>
    %332 = vector.broadcast %330 : vector<1x255xf32> to vector<8x255xf32>
    %333 = arith.mulf %331, %332 : vector<8x255xf32>
    %334 = arith.addf %328, %333 : vector<8x255xf32>
    %335 = vector.extract_strided_slice %2 {offsets = [0, 6], sizes = [8, 1], strides = [1, 1]} : vector<8x16xf32> to vector<8x1xf32>
    %336 = vector.extract_strided_slice %4 {offsets = [2, 0], sizes = [1, 255], strides = [1, 1]} : vector<16x255xf32> to vector<1x255xf32>
    %337 = vector.broadcast %335 : vector<8x1xf32> to vector<8x255xf32>
    %338 = vector.broadcast %336 : vector<1x255xf32> to vector<8x255xf32>
    %339 = arith.mulf %337, %338 : vector<8x255xf32>
    %340 = arith.addf %334, %339 : vector<8x255xf32>
    %341 = vector.extract_strided_slice %2 {offsets = [0, 7], sizes = [8, 1], strides = [1, 1]} : vector<8x16xf32> to vector<8x1xf32>
    %342 = vector.extract_strided_slice %4 {offsets = [3, 0], sizes = [1, 255], strides = [1, 1]} : vector<16x255xf32> to vector<1x255xf32>
    %343 = vector.broadcast %341 : vector<8x1xf32> to vector<8x255xf32>
    %344 = vector.broadcast %342 : vector<1x255xf32> to vector<8x255xf32>
    %345 = arith.mulf %343, %344 : vector<8x255xf32>
    %346 = arith.addf %340, %345 : vector<8x255xf32>
    %347 = vector.extract_strided_slice %2 {offsets = [0, 8], sizes = [8, 1], strides = [1, 1]} : vector<8x16xf32> to vector<8x1xf32>
    %348 = vector.extract_strided_slice %4 {offsets = [4, 0], sizes = [1, 255], strides = [1, 1]} : vector<16x255xf32> to vector<1x255xf32>
    %349 = vector.broadcast %347 : vector<8x1xf32> to vector<8x255xf32>
    %350 = vector.broadcast %348 : vector<1x255xf32> to vector<8x255xf32>
    %351 = arith.mulf %349, %350 : vector<8x255xf32>
    %352 = arith.addf %346, %351 : vector<8x255xf32>
    %353 = vector.extract_strided_slice %2 {offsets = [0, 9], sizes = [8, 1], strides = [1, 1]} : vector<8x16xf32> to vector<8x1xf32>
    %354 = vector.extract_strided_slice %4 {offsets = [5, 0], sizes = [1, 255], strides = [1, 1]} : vector<16x255xf32> to vector<1x255xf32>
    %355 = vector.broadcast %353 : vector<8x1xf32> to vector<8x255xf32>
    %356 = vector.broadcast %354 : vector<1x255xf32> to vector<8x255xf32>
    %357 = arith.mulf %355, %356 : vector<8x255xf32>
    %358 = arith.addf %352, %357 : vector<8x255xf32>
    %359 = vector.extract_strided_slice %2 {offsets = [0, 10], sizes = [8, 1], strides = [1, 1]} : vector<8x16xf32> to vector<8x1xf32>
    %360 = vector.extract_strided_slice %4 {offsets = [6, 0], sizes = [1, 255], strides = [1, 1]} : vector<16x255xf32> to vector<1x255xf32>
    %361 = vector.broadcast %359 : vector<8x1xf32> to vector<8x255xf32>
    %362 = vector.broadcast %360 : vector<1x255xf32> to vector<8x255xf32>
    %363 = arith.mulf %361, %362 : vector<8x255xf32>
    %364 = arith.addf %358, %363 : vector<8x255xf32>
    %365 = vector.extract_strided_slice %2 {offsets = [0, 11], sizes = [8, 1], strides = [1, 1]} : vector<8x16xf32> to vector<8x1xf32>
    %366 = vector.extract_strided_slice %4 {offsets = [7, 0], sizes = [1, 255], strides = [1, 1]} : vector<16x255xf32> to vector<1x255xf32>
    %367 = vector.broadcast %365 : vector<8x1xf32> to vector<8x255xf32>
    %368 = vector.broadcast %366 : vector<1x255xf32> to vector<8x255xf32>
    %369 = arith.mulf %367, %368 : vector<8x255xf32>
    %370 = arith.addf %364, %369 : vector<8x255xf32>
    %371 = vector.extract_strided_slice %2 {offsets = [0, 12], sizes = [8, 1], strides = [1, 1]} : vector<8x16xf32> to vector<8x1xf32>
    %372 = vector.extract_strided_slice %4 {offsets = [8, 0], sizes = [1, 255], strides = [1, 1]} : vector<16x255xf32> to vector<1x255xf32>
    %373 = vector.broadcast %371 : vector<8x1xf32> to vector<8x255xf32>
    %374 = vector.broadcast %372 : vector<1x255xf32> to vector<8x255xf32>
    %375 = arith.mulf %373, %374 : vector<8x255xf32>
    %376 = arith.addf %370, %375 : vector<8x255xf32>
    %377 = vector.extract_strided_slice %2 {offsets = [0, 13], sizes = [8, 1], strides = [1, 1]} : vector<8x16xf32> to vector<8x1xf32>
    %378 = vector.extract_strided_slice %4 {offsets = [9, 0], sizes = [1, 255], strides = [1, 1]} : vector<16x255xf32> to vector<1x255xf32>
    %379 = vector.broadcast %377 : vector<8x1xf32> to vector<8x255xf32>
    %380 = vector.broadcast %378 : vector<1x255xf32> to vector<8x255xf32>
    %381 = arith.mulf %379, %380 : vector<8x255xf32>
    %382 = arith.addf %376, %381 : vector<8x255xf32>
    %383 = vector.extract_strided_slice %2 {offsets = [0, 14], sizes = [8, 1], strides = [1, 1]} : vector<8x16xf32> to vector<8x1xf32>
    %384 = vector.extract_strided_slice %4 {offsets = [10, 0], sizes = [1, 255], strides = [1, 1]} : vector<16x255xf32> to vector<1x255xf32>
    %385 = vector.broadcast %383 : vector<8x1xf32> to vector<8x255xf32>
    %386 = vector.broadcast %384 : vector<1x255xf32> to vector<8x255xf32>
    %387 = arith.mulf %385, %386 : vector<8x255xf32>
    %388 = arith.addf %382, %387 : vector<8x255xf32>
    %389 = vector.extract_strided_slice %2 {offsets = [0, 15], sizes = [8, 1], strides = [1, 1]} : vector<8x16xf32> to vector<8x1xf32>
    %390 = vector.extract_strided_slice %4 {offsets = [11, 0], sizes = [1, 255], strides = [1, 1]} : vector<16x255xf32> to vector<1x255xf32>
    %391 = vector.broadcast %389 : vector<8x1xf32> to vector<8x255xf32>
    %392 = vector.broadcast %390 : vector<1x255xf32> to vector<8x255xf32>
    %393 = arith.mulf %391, %392 : vector<8x255xf32>
    %394 = arith.addf %388, %393 : vector<8x255xf32>
    %395 = arith.maximumf %297, %394 : vector<8x255xf32>
    %c0_7 = arith.constant 0 : index
    %c0_8 = arith.constant 0 : index
    %396 = vector.load %arg3[%c0_7, %c0_8] : memref<8x1xf32, #tpu.memory_space<vmem>>, vector<8x1xf32>
    %397 = vector.broadcast %396 : vector<8x1xf32> to vector<8x255xf32>
    %398 = arith.addf %395, %397 : vector<8x255xf32>
    %cst_9 = arith.constant 0.000000e+00 : f32
    %399 = vector.broadcast %cst_9 : f32 to vector<8x255xf32>
    %400 = arith.maximumf %398, %399 : vector<8x255xf32>
    %401 = vector.extract_strided_slice %400 {offsets = [0, 0], sizes = [8, 253], strides = [1, 1]} : vector<8x255xf32> to vector<8x253xf32>
    %402 = vector.extract_strided_slice %400 {offsets = [0, 1], sizes = [8, 253], strides = [1, 1]} : vector<8x255xf32> to vector<8x253xf32>
    %403 = vector.extract_strided_slice %400 {offsets = [0, 2], sizes = [8, 253], strides = [1, 1]} : vector<8x255xf32> to vector<8x253xf32>
    %404 = tpu.concatenate %401, %402, %403 in 0 : vector<8x253xf32>, vector<8x253xf32>, vector<8x253xf32> -> vector<24x253xf32>
    %c0_10 = arith.constant 0 : index
    %c0_11 = arith.constant 0 : index
    %405 = vector.load %arg4[%c0_10, %c0_11] : memref<8x24xf32, #tpu.memory_space<vmem>>, vector<8x24xf32>
    %cst_12 = arith.constant dense<0.000000e+00> : vector<8x253xf32>
    %406 = tpu.matmul %405, %404, %cst_12 {dimension_numbers = #tpu.dot_dimension_numbers<[1], [0], [0], [1], [0, 0, 1, 1], [], []>} : vector<8x24xf32>, vector<24x253xf32>, vector<8x253xf32> -> vector<8x253xf32>
    %c0_13 = arith.constant 0 : index
    %c0_14 = arith.constant 0 : index
    %407 = vector.load %arg5[%c0_13, %c0_14] : memref<8x1xf32, #tpu.memory_space<vmem>>, vector<8x1xf32>
    %408 = vector.broadcast %407 : vector<8x1xf32> to vector<8x253xf32>
    %409 = arith.addf %406, %408 : vector<8x253xf32>
    %cst_15 = arith.constant 0.000000e+00 : f32
    %410 = vector.broadcast %cst_15 : f32 to vector<8x253xf32>
    %411 = arith.maximumf %409, %410 : vector<8x253xf32>
    %412 = vector.extract_strided_slice %411 {offsets = [0, 0], sizes = [8, 250], strides = [1, 1]} : vector<8x253xf32> to vector<8x250xf32>
    %413 = vector.extract_strided_slice %411 {offsets = [0, 1], sizes = [8, 250], strides = [1, 1]} : vector<8x253xf32> to vector<8x250xf32>
    %414 = arith.maximumf %412, %413 : vector<8x250xf32>
    %415 = vector.extract_strided_slice %411 {offsets = [0, 2], sizes = [8, 250], strides = [1, 1]} : vector<8x253xf32> to vector<8x250xf32>
    %416 = arith.maximumf %414, %415 : vector<8x250xf32>
    %417 = vector.extract_strided_slice %411 {offsets = [0, 3], sizes = [8, 250], strides = [1, 1]} : vector<8x253xf32> to vector<8x250xf32>
    %418 = arith.maximumf %416, %417 : vector<8x250xf32>
    %419 = tpu.iota {dimensions = array<i32: 0>} : vector<250x63xi32>
    %420 = tpu.iota {dimensions = array<i32: 1>} : vector<250x63xi32>
    %c4_i32 = arith.constant 4 : i32
    %421 = vector.broadcast %c4_i32 : i32 to vector<250x63xi32>
    %422 = arith.muli %421, %420 : vector<250x63xi32>
    %423 = arith.cmpi eq, %419, %422 : vector<250x63xi32>
    %424 = arith.extui %423 : vector<250x63xi1> to vector<250x63xi32>
    %425 = arith.sitofp %424 : vector<250x63xi32> to vector<250x63xf32>
    %cst_16 = arith.constant dense<0.000000e+00> : vector<8x63xf32>
    %426 = tpu.matmul %418, %425, %cst_16 {dimension_numbers = #tpu.dot_dimension_numbers<[1], [0], [0], [1], [0, 0, 1, 1], [], []>} : vector<8x250xf32>, vector<250x63xf32>, vector<8x63xf32> -> vector<8x63xf32>
    %427 = vector.extract_strided_slice %426 {offsets = [0, 0], sizes = [8, 61], strides = [1, 1]} : vector<8x63xf32> to vector<8x61xf32>
    %428 = vector.extract_strided_slice %426 {offsets = [0, 1], sizes = [8, 61], strides = [1, 1]} : vector<8x63xf32> to vector<8x61xf32>
    %429 = vector.extract_strided_slice %426 {offsets = [0, 2], sizes = [8, 61], strides = [1, 1]} : vector<8x63xf32> to vector<8x61xf32>
    %430 = tpu.concatenate %427, %428, %429 in 0 : vector<8x61xf32>, vector<8x61xf32>, vector<8x61xf32> -> vector<24x61xf32>
    %c0_17 = arith.constant 0 : index
    %c0_18 = arith.constant 0 : index
    %431 = vector.load %arg6[%c0_17, %c0_18] : memref<16x24xf32, #tpu.memory_space<vmem>>, vector<16x24xf32>
    %cst_19 = arith.constant dense<0.000000e+00> : vector<16x61xf32>
    %432 = tpu.matmul %431, %430, %cst_19 {dimension_numbers = #tpu.dot_dimension_numbers<[1], [0], [0], [1], [0, 0, 1, 1], [], []>} : vector<16x24xf32>, vector<24x61xf32>, vector<16x61xf32> -> vector<16x61xf32>
    %c0_20 = arith.constant 0 : index
    %c0_21 = arith.constant 0 : index
    %433 = vector.load %arg7[%c0_20, %c0_21] : memref<16x1xf32, #tpu.memory_space<vmem>>, vector<16x1xf32>
    %434 = vector.broadcast %433 : vector<16x1xf32> to vector<16x61xf32>
    %435 = arith.addf %432, %434 : vector<16x61xf32>
    %cst_22 = arith.constant 0.000000e+00 : f32
    %436 = vector.broadcast %cst_22 : f32 to vector<16x61xf32>
    %437 = arith.maximumf %435, %436 : vector<16x61xf32>
    %438 = vector.extract_strided_slice %437 {offsets = [0, 0], sizes = [16, 58], strides = [1, 1]} : vector<16x61xf32> to vector<16x58xf32>
    %439 = vector.extract_strided_slice %437 {offsets = [0, 1], sizes = [16, 58], strides = [1, 1]} : vector<16x61xf32> to vector<16x58xf32>
    %440 = arith.maximumf %438, %439 : vector<16x58xf32>
    %441 = vector.extract_strided_slice %437 {offsets = [0, 2], sizes = [16, 58], strides = [1, 1]} : vector<16x61xf32> to vector<16x58xf32>
    %442 = arith.maximumf %440, %441 : vector<16x58xf32>
    %443 = vector.extract_strided_slice %437 {offsets = [0, 3], sizes = [16, 58], strides = [1, 1]} : vector<16x61xf32> to vector<16x58xf32>
    %444 = arith.maximumf %442, %443 : vector<16x58xf32>
    %445 = tpu.iota {dimensions = array<i32: 0>} : vector<58x15xi32>
    %446 = tpu.iota {dimensions = array<i32: 1>} : vector<58x15xi32>
    %c4_i32_23 = arith.constant 4 : i32
    %447 = vector.broadcast %c4_i32_23 : i32 to vector<58x15xi32>
    %448 = arith.muli %447, %446 : vector<58x15xi32>
    %449 = arith.cmpi eq, %445, %448 : vector<58x15xi32>
    %450 = arith.extui %449 : vector<58x15xi1> to vector<58x15xi32>
    %451 = arith.sitofp %450 : vector<58x15xi32> to vector<58x15xf32>
    %cst_24 = arith.constant dense<0.000000e+00> : vector<16x15xf32>
    %452 = tpu.matmul %444, %451, %cst_24 {dimension_numbers = #tpu.dot_dimension_numbers<[1], [0], [0], [1], [0, 0, 1, 1], [], []>} : vector<16x58xf32>, vector<58x15xf32>, vector<16x15xf32> -> vector<16x15xf32>
    %453 = vector.extract_strided_slice %452 {offsets = [0, 0], sizes = [16, 13], strides = [1, 1]} : vector<16x15xf32> to vector<16x13xf32>
    %454 = vector.extract_strided_slice %452 {offsets = [0, 1], sizes = [16, 13], strides = [1, 1]} : vector<16x15xf32> to vector<16x13xf32>
    %455 = vector.extract_strided_slice %452 {offsets = [0, 2], sizes = [16, 13], strides = [1, 1]} : vector<16x15xf32> to vector<16x13xf32>
    %456 = tpu.concatenate %453, %454, %455 in 0 : vector<16x13xf32>, vector<16x13xf32>, vector<16x13xf32> -> vector<48x13xf32>
    %c0_25 = arith.constant 0 : index
    %c0_26 = arith.constant 0 : index
    %457 = vector.load %arg8[%c0_25, %c0_26] : memref<16x48xf32, #tpu.memory_space<vmem>>, vector<16x48xf32>
    %cst_27 = arith.constant dense<0.000000e+00> : vector<16x13xf32>
    %458 = tpu.matmul %457, %456, %cst_27 {dimension_numbers = #tpu.dot_dimension_numbers<[1], [0], [0], [1], [0, 0, 1, 1], [], []>} : vector<16x48xf32>, vector<48x13xf32>, vector<16x13xf32> -> vector<16x13xf32>
    %c0_28 = arith.constant 0 : index
    %c0_29 = arith.constant 0 : index
    %459 = vector.load %arg9[%c0_28, %c0_29] : memref<16x1xf32, #tpu.memory_space<vmem>>, vector<16x1xf32>
    %460 = vector.broadcast %459 : vector<16x1xf32> to vector<16x13xf32>
    %461 = arith.addf %458, %460 : vector<16x13xf32>
    %cst_30 = arith.constant 0.000000e+00 : f32
    %462 = vector.broadcast %cst_30 : f32 to vector<16x13xf32>
    %463 = arith.maximumf %461, %462 : vector<16x13xf32>
    %464 = vector.extract_strided_slice %463 {offsets = [0, 0], sizes = [16, 10], strides = [1, 1]} : vector<16x13xf32> to vector<16x10xf32>
    %465 = vector.extract_strided_slice %463 {offsets = [0, 1], sizes = [16, 10], strides = [1, 1]} : vector<16x13xf32> to vector<16x10xf32>
    %466 = arith.maximumf %464, %465 : vector<16x10xf32>
    %467 = vector.extract_strided_slice %463 {offsets = [0, 2], sizes = [16, 10], strides = [1, 1]} : vector<16x13xf32> to vector<16x10xf32>
    %468 = arith.maximumf %466, %467 : vector<16x10xf32>
    %469 = vector.extract_strided_slice %463 {offsets = [0, 3], sizes = [16, 10], strides = [1, 1]} : vector<16x13xf32> to vector<16x10xf32>
    %470 = arith.maximumf %468, %469 : vector<16x10xf32>
    %471 = tpu.iota {dimensions = array<i32: 0>} : vector<10x3xi32>
    %472 = tpu.iota {dimensions = array<i32: 1>} : vector<10x3xi32>
    %c4_i32_31 = arith.constant 4 : i32
    %473 = vector.broadcast %c4_i32_31 : i32 to vector<10x3xi32>
    %474 = arith.muli %473, %472 : vector<10x3xi32>
    %475 = arith.cmpi eq, %471, %474 : vector<10x3xi32>
    %476 = arith.extui %475 : vector<10x3xi1> to vector<10x3xi32>
    %477 = arith.sitofp %476 : vector<10x3xi32> to vector<10x3xf32>
    %cst_32 = arith.constant dense<0.000000e+00> : vector<16x3xf32>
    %478 = tpu.matmul %470, %477, %cst_32 {dimension_numbers = #tpu.dot_dimension_numbers<[1], [0], [0], [1], [0, 0, 1, 1], [], []>} : vector<16x10xf32>, vector<10x3xf32>, vector<16x3xf32> -> vector<16x3xf32>
    %c0_33 = arith.constant 0 : index
    %c0_34 = arith.constant 0 : index
    %479 = vector.load %arg10[%c0_33, %c0_34] : memref<10x16xf32, #tpu.memory_space<vmem>>, vector<10x16xf32>
    %cst_35 = arith.constant dense<0.000000e+00> : vector<10x3xf32>
    %480 = tpu.matmul %479, %478, %cst_35 {dimension_numbers = #tpu.dot_dimension_numbers<[1], [0], [0], [1], [0, 0, 1, 1], [], []>} : vector<10x16xf32>, vector<16x3xf32>, vector<10x3xf32> -> vector<10x3xf32>
    %cst_36 = arith.constant dense<0.000000e+00> : vector<10xf32>
    %481 = vector.multi_reduction <add>, %480, %cst_36 [1] : vector<10x3xf32> to vector<10xf32>
    %482 = vector.shape_cast %481 : vector<10xf32> to vector<10x1xf32>
    %cst_37 = arith.constant 3.000000e+00 : f32
    %483 = vector.broadcast %cst_37 : f32 to vector<10x1xf32>
    %484 = arith.divf %482, %483 : vector<10x1xf32>
    %c0_38 = arith.constant 0 : index
    %c0_39 = arith.constant 0 : index
    %485 = vector.load %arg11[%c0_38, %c0_39] : memref<10x1xf32, #tpu.memory_space<vmem>>, vector<10x1xf32>
    %486 = arith.addf %484, %485 : vector<10x1xf32>
    %cst_40 = arith.constant dense<0xFF800000> : vector<1xf32>
    %487 = vector.multi_reduction <maximumf>, %486, %cst_40 [0] : vector<10x1xf32> to vector<1xf32>
    %488 = vector.shape_cast %487 : vector<1xf32> to vector<1x1xf32>
    %489 = vector.broadcast %488 : vector<1x1xf32> to vector<10x1xf32>
    %490 = arith.subf %486, %489 : vector<10x1xf32>
    %491 = math.exp %490 : vector<10x1xf32>
    %cst_41 = arith.constant dense<0.000000e+00> : vector<1xf32>
    %492 = vector.multi_reduction <add>, %491, %cst_41 [0] : vector<10x1xf32> to vector<1xf32>
    %493 = vector.shape_cast %492 : vector<1xf32> to vector<1x1xf32>
    %494 = math.log %493 : vector<1x1xf32>
    %495 = vector.broadcast %494 : vector<1x1xf32> to vector<10x1xf32>
    %496 = arith.subf %490, %495 : vector<10x1xf32>
    %c0_42 = arith.constant 0 : index
    %c0_43 = arith.constant 0 : index
    %c0_44 = arith.constant 0 : index
    %497 = vector.load %arg12[%c0_42, %c0_43, %c0_44] : memref<1x10x1xf32, #tpu.memory_space<vmem>>, vector<1x10x1xf32>
    %498 = vector.shape_cast %497 : vector<1x10x1xf32> to vector<10x1xf32>
    %499 = vector.shape_cast %496 : vector<10x1xf32> to vector<1x10x1xf32>
    tpu.vector_store %arg12[%c0_42, %c0_43, %c0_44], %499 {strides = array<i32>} : memref<1x10x1xf32, #tpu.memory_space<vmem>>, vector<1x10x1xf32>,
    return
  }
  func.func @transform_0(%arg0: i32) -> (i32, i32, i32) {
    %c0_i32 = arith.constant 0 : i32
    %c0_i32_0 = arith.constant 0 : i32
    %c0_i32_1 = arith.constant 0 : i32
    return %arg0, %c0_i32, %c0_i32_0 : i32, i32, i32
  }
  func.func @transform_1(%arg0: i32) -> (i32, i32) {
    %c0_i32 = arith.constant 0 : i32
    %c0_i32_0 = arith.constant 0 : i32
    %c0_i32_1 = arith.constant 0 : i32
    return %c0_i32, %c0_i32_0 : i32, i32
  }
  func.func @transform_2(%arg0: i32) -> (i32, i32) {
    %c0_i32 = arith.constant 0 : i32
    %c0_i32_0 = arith.constant 0 : i32
    %c0_i32_1 = arith.constant 0 : i32
    return %c0_i32, %c0_i32_0 : i32, i32
  }
  func.func @transform_3(%arg0: i32) -> (i32, i32) {
    %c0_i32 = arith.constant 0 : i32
    %c0_i32_0 = arith.constant 0 : i32
    %c0_i32_1 = arith.constant 0 : i32
    return %c0_i32, %c0_i32_0 : i32, i32
  }
  func.func @transform_4(%arg0: i32) -> (i32, i32) {
    %c0_i32 = arith.constant 0 : i32
    %c0_i32_0 = arith.constant 0 : i32
    %c0_i32_1 = arith.constant 0 : i32
    return %c0_i32, %c0_i32_0 : i32, i32
  }
  func.func @transform_5(%arg0: i32) -> (i32, i32) {
    %c0_i32 = arith.constant 0 : i32
    %c0_i32_0 = arith.constant 0 : i32
    %c0_i32_1 = arith.constant 0 : i32
    return %c0_i32, %c0_i32_0 : i32, i32
  }
  func.func @transform_6(%arg0: i32) -> (i32, i32) {
    %c0_i32 = arith.constant 0 : i32
    %c0_i32_0 = arith.constant 0 : i32
    %c0_i32_1 = arith.constant 0 : i32
    return %c0_i32, %c0_i32_0 : i32, i32
  }
  func.func @transform_7(%arg0: i32) -> (i32, i32) {
    %c0_i32 = arith.constant 0 : i32
    %c0_i32_0 = arith.constant 0 : i32
    %c0_i32_1 = arith.constant 0 : i32
    return %c0_i32, %c0_i32_0 : i32, i32
  }
  func.func @transform_8(%arg0: i32) -> (i32, i32) {
    %c0_i32 = arith.constant 0 : i32
    %c0_i32_0 = arith.constant 0 : i32
    %c0_i32_1 = arith.constant 0 : i32
    return %c0_i32, %c0_i32_0 : i32, i32
  }
  func.func @transform_9(%arg0: i32) -> (i32, i32) {
    %c0_i32 = arith.constant 0 : i32
    %c0_i32_0 = arith.constant 0 : i32
    %c0_i32_1 = arith.constant 0 : i32
    return %c0_i32, %c0_i32_0 : i32, i32
  }
  func.func @transform_10(%arg0: i32) -> (i32, i32) {
    %c0_i32 = arith.constant 0 : i32
    %c0_i32_0 = arith.constant 0 : i32
    %c0_i32_1 = arith.constant 0 : i32
    return %c0_i32, %c0_i32_0 : i32, i32
  }
  func.func @transform_11(%arg0: i32) -> (i32, i32, i32) {
    %c0_i32 = arith.constant 0 : i32
    %c0_i32_0 = arith.constant 0 : i32
    %c0_i32_1 = arith.constant 0 : i32
    return %arg0, %c0_i32, %c0_i32_0 : i32, i32, i32
  }
}

</mosaic_0001>

<llo_original>
// kernel: fwd.1
$region0: #{fwd.1}
  #allocation0 [shape = 'u32[]', space=smem, size = 0x4, offset = 0x4, fixed_abs, tag = 'smem constant byte address 0x4 - core index']
  #allocation1 [shape = 'u32[144,128]{1,0:T(1,128)}', space=vmem, size = 0x12000, scoped, tag = 'internal scratch']
  %s0 = inlined_call_operand.vmem [shape: f32[2,16,256], index: 0, kind: input, shape index: {}]
  %s1 = inlined_call_operand.vmem [shape: f32[8,16], index: 1, kind: input, shape index: {}]
  %s2 = inlined_call_operand.vmem [shape: f32[8,1], index: 2, kind: input, shape index: {}]
  %s3 = inlined_call_operand.vmem [shape: f32[8,24], index: 3, kind: input, shape index: {}]
  %s4 = inlined_call_operand.vmem [shape: f32[8,1], index: 4, kind: input, shape index: {}]
  %s5 = inlined_call_operand.vmem [shape: f32[16,24], index: 5, kind: input, shape index: {}]
  %s6 = inlined_call_operand.vmem [shape: f32[16,1], index: 6, kind: input, shape index: {}]
  %s7 = inlined_call_operand.vmem [shape: f32[16,48], index: 7, kind: input, shape index: {}]
  %s8 = inlined_call_operand.vmem [shape: f32[16,1], index: 8, kind: input, shape index: {}]
  %s9 = inlined_call_operand.vmem [shape: f32[10,16], index: 9, kind: input, shape index: {}]
  %s10 = inlined_call_operand.vmem [shape: f32[10,1], index: 10, kind: input, shape index: {}]
  %s11 = inlined_call_operand.vmem [shape: f32[2,10,1], index: 11, kind: output, shape index: {}]
  %s12 = sld [smem:[#allocation0]]
  $region77: #{fwd.1} parent=0
    _
  %s14 = ssub.s32 1, %s12
  %s15 = scalar_select 0, %s14, %s12
  loop: start=0, step=1, limit=4
  $region2: #{fwd.1} parent=0 // loop_pre_header
    _
  $region3: #{fwd.1} parent=0 // loop_header
    %s17 = sphi 0, %s21
    %p18 = scmp.ge.s32.totalorder %s17, 4
    %s27 = sphi 0, %s29
    %s30 = sphi 0, %s27
    %s31 = sphi 0, %s30
    %s47 = sphi 0, %s31
    %s51 = sphi 0, %s51
    %s53 = sphi 0, %s51
    %s54 = sphi 0, %s53
    %s68 = sphi 0, %s54
    %s72 = sphi 0, %s72
    %s74 = sphi 0, %s72
    %s75 = sphi 0, %s74
    %s89 = sphi 0, %s75
    %s93 = sphi 0, %s93
    %s95 = sphi 0, %s93
    %s96 = sphi 0, %s95
    %s110 = sphi 0, %s96
    %s114 = sphi 0, %s114
    %s116 = sphi 0, %s114
    %s117 = sphi 0, %s116
    %s131 = sphi 0, %s117
    %s135 = sphi 0, %s135
    %s137 = sphi 0, %s135
    %s138 = sphi 0, %s137
    %s152 = sphi 0, %s138
    %s156 = sphi 0, %s156
    %s158 = sphi 0, %s156
    %s159 = sphi 0, %s158
    %s173 = sphi 0, %s159
    %s177 = sphi 0, %s177
    %s179 = sphi 0, %s177
    %s180 = sphi 0, %s179
    %s194 = sphi 0, %s180
    %s198 = sphi 0, %s198
    %s200 = sphi 0, %s198
    %s201 = sphi 0, %s200
    %s215 = sphi 0, %s201
    %s219 = sphi 0, %s219
    %s221 = sphi 0, %s219
    %s222 = sphi 0, %s221
    %s236 = sphi 0, %s222
    %s240 = sphi 0, %s240
    %s242 = sphi 0, %s240
    %s243 = sphi 0, %s242
    %s257 = sphi 0, %s243
    %s263 = sphi 0, %s265
    %s266 = sphi 0, %s263
    %s267 = sphi 0, %s266
    %s283 = sphi 0, %s267
  $region4: #{fwd.1} parent=0 // loop_header_branch
    %20 = sbr.rel (%p18) target = $region8
  $region5: #{fwd.1} parent=0 // loop_body
    %s22 = ssub.s32 %s17, 1
    %s23 = ssub.s32 %s17, 2
    %s24 = sadd.s32 %s17, 1
    %s25 = ssub.s32 %s17, %s24
    %p26 = scmp.eq.s32.totalorder %s25, 0
    %s28 = sadd.s32 %s27, 1
    %s29 = scalar_select %p26, %s27, %s28
    %p32 = pneg %p26
    %p33 = scmp.eq.s32.totalorder %s17, 1
    %p34 = por %p32, %p33
    %p35 = scmp.ne.s32.totalorder %s27, %s30
    %p36 = scmp.eq.s32.totalorder %s17, 0
    %p37 = por %p35, %p36
    %p38 = scmp.ne.s32.totalorder %s27, %s30
    %p39 = scmp.eq.s32.totalorder %s22, 1
    %p40 = por %p38, %p39
    %p41 = scmp.ne.s32.totalorder %s30, %s31
    %p42 = scmp.eq.s32.totalorder %s22, 0
    %p43 = por %p41, %p42
    %p44 = scmp.ne.s32.totalorder %s30, %s31
    %p45 = scmp.eq.s32.totalorder %s23, 1
    %p46 = por %p44, %p45
    %p48 = scmp.ne.s32.totalorder %s31, %s47
    %p49 = scmp.eq.s32.totalorder %s23, 0
    %p50 = por %p48, %p49
    %s52 = sadd.s32 %s51, 1
    %p55 = scmp.eq.s32.totalorder %s17, 1
    %p56 = scmp.ne.s32.totalorder %s51, %s53
    %p57 = scmp.eq.s32.totalorder %s17, 0
    %p58 = por %p56, %p57
    %p59 = scmp.ne.s32.totalorder %s51, %s53
    %p60 = scmp.eq.s32.totalorder %s22, 1
    %p61 = por %p59, %p60
    %p62 = scmp.ne.s32.totalorder %s53, %s54
    %p63 = scmp.eq.s32.totalorder %s22, 0
    %p64 = por %p62, %p63
    %p65 = scmp.ne.s32.totalorder %s53, %s54
    %p66 = scmp.eq.s32.totalorder %s23, 1
    %p67 = por %p65, %p66
    %p69 = scmp.ne.s32.totalorder %s54, %s68
    %p70 = scmp.eq.s32.totalorder %s23, 0
    %p71 = por %p69, %p70
    %s73 = sadd.s32 %s72, 1
    %p76 = scmp.eq.s32.totalorder %s17, 1
    %p77 = scmp.ne.s32.totalorder %s72, %s74
    %p78 = scmp.eq.s32.totalorder %s17, 0
    %p79 = por %p77, %p78
    %p80 = scmp.ne.s32.totalorder %s72, %s74
    %p81 = scmp.eq.s32.totalorder %s22, 1
    %p82 = por %p80, %p81
    %p83 = scmp.ne.s32.totalorder %s74, %s75
    %p84 = scmp.eq.s32.totalorder %s22, 0
    %p85 = por %p83, %p84
    %p86 = scmp.ne.s32.totalorder %s74, %s75
    %p87 = scmp.eq.s32.totalorder %s23, 1
    %p88 = por %p86, %p87
    %p90 = scmp.ne.s32.totalorder %s75, %s89
    %p91 = scmp.eq.s32.totalorder %s23, 0
    %p92 = por %p90, %p91
    %s94 = sadd.s32 %s93, 1
    %p97 = scmp.eq.s32.totalorder %s17, 1
    %p98 = scmp.ne.s32.totalorder %s93, %s95
    %p99 = scmp.eq.s32.totalorder %s17, 0
    %p100 = por %p98, %p99
    %p101 = scmp.ne.s32.totalorder %s93, %s95
    %p102 = scmp.eq.s32.totalorder %s22, 1
    %p103 = por %p101, %p102
    %p104 = scmp.ne.s32.totalorder %s95, %s96
    %p105 = scmp.eq.s32.totalorder %s22, 0
    %p106 = por %p104, %p105
    %p107 = scmp.ne.s32.totalorder %s95, %s96
    %p108 = scmp.eq.s32.totalorder %s23, 1
    %p109 = por %p107, %p108
    %p111 = scmp.ne.s32.totalorder %s96, %s110
    %p112 = scmp.eq.s32.totalorder %s23, 0
    %p113 = por %p111, %p112
    %s115 = sadd.s32 %s114, 1
    %p118 = scmp.eq.s32.totalorder %s17, 1
    %p119 = scmp.ne.s32.totalorder %s114, %s116
    %p120 = scmp.eq.s32.totalorder %s17, 0
    %p121 = por %p119, %p120
    %p122 = scmp.ne.s32.totalorder %s114, %s116
    %p123 = scmp.eq.s32.totalorder %s22, 1
    %p124 = por %p122, %p123
    %p125 = scmp.ne.s32.totalorder %s116, %s117
    %p126 = scmp.eq.s32.totalorder %s22, 0
    %p127 = por %p125, %p126
    %p128 = scmp.ne.s32.totalorder %s116, %s117
    %p129 = scmp.eq.s32.totalorder %s23, 1
    %p130 = por %p128, %p129
    %p132 = scmp.ne.s32.totalorder %s117, %s131
    %p133 = scmp.eq.s32.totalorder %s23, 0
    %p134 = por %p132, %p133
    %s136 = sadd.s32 %s135, 1
    %p139 = scmp.eq.s32.totalorder %s17, 1
    %p140 = scmp.ne.s32.totalorder %s135, %s137
    %p141 = scmp.eq.s32.totalorder %s17, 0
    %p142 = por %p140, %p141
    %p143 = scmp.ne.s32.totalorder %s135, %s137
    %p144 = scmp.eq.s32.totalorder %s22, 1
    %p145 = por %p143, %p144
    %p146 = scmp.ne.s32.totalorder %s137, %s138
    %p147 = scmp.eq.s32.totalorder %s22, 0
    %p148 = por %p146, %p147
    %p149 = scmp.ne.s32.totalorder %s137, %s138
    %p150 = scmp.eq.s32.totalorder %s23, 1
    %p151 = por %p149, %p150
    %p153 = scmp.ne.s32.totalorder %s138, %s152
    %p154 = scmp.eq.s32.totalorder %s23, 0
    %p155 = por %p153, %p154
    %s157 = sadd.s32 %s156, 1
    %p160 = scmp.eq.s32.totalorder %s17, 1
    %p161 = scmp.ne.s32.totalorder %s156, %s158
    %p162 = scmp.eq.s32.totalorder %s17, 0
    %p163 = por %p161, %p162
    %p164 = scmp.ne.s32.totalorder %s156, %s158
    %p165 = scmp.eq.s32.totalorder %s22, 1
    %p166 = por %p164, %p165
    %p167 = scmp.ne.s32.totalorder %s158, %s159
    %p168 = scmp.eq.s32.totalorder %s22, 0
    %p169 = por %p167, %p168
    %p170 = scmp.ne.s32.totalorder %s158, %s159
    %p171 = scmp.eq.s32.totalorder %s23, 1
    %p172 = por %p170, %p171
    %p174 = scmp.ne.s32.totalorder %s159, %s173
    %p175 = scmp.eq.s32.totalorder %s23, 0
    %p176 = por %p174, %p175
    %s178 = sadd.s32 %s177, 1
    %p181 = scmp.eq.s32.totalorder %s17, 1
    %p182 = scmp.ne.s32.totalorder %s177, %s179
    %p183 = scmp.eq.s32.totalorder %s17, 0
    %p184 = por %p182, %p183
    %p185 = scmp.ne.s32.totalorder %s177, %s179
    %p186 = scmp.eq.s32.totalorder %s22, 1
    %p187 = por %p185, %p186
    %p188 = scmp.ne.s32.totalorder %s179, %s180
    %p189 = scmp.eq.s32.totalorder %s22, 0
    %p190 = por %p188, %p189
    %p191 = scmp.ne.s32.totalorder %s179, %s180
    %p192 = scmp.eq.s32.totalorder %s23, 1
    %p193 = por %p191, %p192
    %p195 = scmp.ne.s32.totalorder %s180, %s194
    %p196 = scmp.eq.s32.totalorder %s23, 0
    %p197 = por %p195, %p196
    %s199 = sadd.s32 %s198, 1
    %p202 = scmp.eq.s32.totalorder %s17, 1
    %p203 = scmp.ne.s32.totalorder %s198, %s200
    %p204 = scmp.eq.s32.totalorder %s17, 0
    %p205 = por %p203, %p204
    %p206 = scmp.ne.s32.totalorder %s198, %s200
    %p207 = scmp.eq.s32.totalorder %s22, 1
    %p208 = por %p206, %p207
    %p209 = scmp.ne.s32.totalorder %s200, %s201
    %p210 = scmp.eq.s32.totalorder %s22, 0
    %p211 = por %p209, %p210
    %p212 = scmp.ne.s32.totalorder %s200, %s201
    %p213 = scmp.eq.s32.totalorder %s23, 1
    %p214 = por %p212, %p213
    %p216 = scmp.ne.s32.totalorder %s201, %s215
    %p217 = scmp.eq.s32.totalorder %s23, 0
    %p218 = por %p216, %p217
    %s220 = sadd.s32 %s219, 1
    %p223 = scmp.eq.s32.totalorder %s17, 1
    %p224 = scmp.ne.s32.totalorder %s219, %s221
    %p225 = scmp.eq.s32.totalorder %s17, 0
    %p226 = por %p224, %p225
    %p227 = scmp.ne.s32.totalorder %s219, %s221
    %p228 = scmp.eq.s32.totalorder %s22, 1
    %p229 = por %p227, %p228
    %p230 = scmp.ne.s32.totalorder %s221, %s222
    %p231 = scmp.eq.s32.totalorder %s22, 0
    %p232 = por %p230, %p231
    %p233 = scmp.ne.s32.totalorder %s221, %s222
    %p234 = scmp.eq.s32.totalorder %s23, 1
    %p235 = por %p233, %p234
    %p237 = scmp.ne.s32.totalorder %s222, %s236
    %p238 = scmp.eq.s32.totalorder %s23, 0
    %p239 = por %p237, %p238
    %s241 = sadd.s32 %s240, 1
    %p244 = scmp.eq.s32.totalorder %s17, 1
    %p245 = scmp.ne.s32.totalorder %s240, %s242
    %p246 = scmp.eq.s32.totalorder %s17, 0
    %p247 = por %p245, %p246
    %p248 = scmp.ne.s32.totalorder %s240, %s242
    %p249 = scmp.eq.s32.totalorder %s22, 1
    %p250 = por %p248, %p249
    %p251 = scmp.ne.s32.totalorder %s242, %s243
    %p252 = scmp.eq.s32.totalorder %s22, 0
    %p253 = por %p251, %p252
    %p254 = scmp.ne.s32.totalorder %s242, %s243
    %p255 = scmp.eq.s32.totalorder %s23, 1
    %p256 = por %p254, %p255
    %p258 = scmp.ne.s32.totalorder %s243, %s257
    %p259 = scmp.eq.s32.totalorder %s23, 0
    %p260 = por %p258, %p259
    %s261 = ssub.s32 %s17, %s24
    %p262 = scmp.eq.s32.totalorder %s261, 0
    %s264 = sadd.s32 %s263, 1
    %s265 = scalar_select %p262, %s263, %s264
    %p268 = pneg %p262
    %p269 = scmp.eq.s32.totalorder %s17, 1
    %p270 = por %p268, %p269
    %p271 = scmp.ne.s32.totalorder %s263, %s266
    %p272 = scmp.eq.s32.totalorder %s17, 0
    %p273 = por %p271, %p272
    %p274 = scmp.ne.s32.totalorder %s263, %s266
    %p275 = scmp.eq.s32.totalorder %s22, 1
    %p276 = por %p274, %p275
    %p277 = scmp.ne.s32.totalorder %s266, %s267
    %p278 = scmp.eq.s32.totalorder %s22, 0
    %p279 = por %p277, %p278
    %p280 = scmp.ne.s32.totalorder %s266, %s267
    %p281 = scmp.eq.s32.totalorder %s23, 1
    %p282 = por %p280, %p281
    %p284 = scmp.ne.s32.totalorder %s267, %s283
    %p285 = scmp.eq.s32.totalorder %s23, 0
    %p286 = por %p284, %p285
    %p287 = scmp.le.s32.totalorder 1, %s17
    %p288 = scmp.lt.s32.totalorder %s17, 3
    %p289 = pnand %p287, %p288
    %p290 = pneg %p289
    // Predicated region
    $region9: #{fwd.1} parent=5 // pred_check
      _
    $region10: #{fwd.1} parent=5 // pred_check_branch
      %292 = sbr.rel (%p289) target = $region12
    $region11: #{fwd.1} parent=5 // pred_region
      %s293 = ssub.s32 %s17, 1
      // Predicated region
      $region13: #{fwd.1} parent=11 // pred_check
        %p294 = pneg %p64
      $region14: #{fwd.1} parent=11 // pred_check_branch
        %296 = sbr.rel (%p294) target = $region16
      $region15: #{fwd.1} parent=11 // pred_region
        _
      $region16: #{fwd.1} parent=11 // pred_fallthru
        _
      // Predicated region
      $region17: #{fwd.1} parent=11 // pred_check
        %p297 = pneg %p85
      $region18: #{fwd.1} parent=11 // pred_check_branch
        %299 = sbr.rel (%p297) target = $region20
      $region19: #{fwd.1} parent=11 // pred_region
        _
      $region20: #{fwd.1} parent=11 // pred_fallthru
        _
      // Predicated region
      $region21: #{fwd.1} parent=11 // pred_check
        %p300 = pneg %p106
      $region22: #{fwd.1} parent=11 // pred_check_branch
        %302 = sbr.rel (%p300) target = $region24
      $region23: #{fwd.1} parent=11 // pred_region
        _
      $region24: #{fwd.1} parent=11 // pred_fallthru
        _
      // Predicated region
      $region25: #{fwd.1} parent=11 // pred_check
        %p303 = pneg %p127
      $region26: #{fwd.1} parent=11 // pred_check_branch
        %305 = sbr.rel (%p303) target = $region28
      $region27: #{fwd.1} parent=11 // pred_region
        _
      $region28: #{fwd.1} parent=11 // pred_fallthru
        _
      // Predicated region
      $region29: #{fwd.1} parent=11 // pred_check
        %p306 = pneg %p148
      $region30: #{fwd.1} parent=11 // pred_check_branch
        %308 = sbr.rel (%p306) target = $region32
      $region31: #{fwd.1} parent=11 // pred_region
        _
      $region32: #{fwd.1} parent=11 // pred_fallthru
        _
      // Predicated region
      $region33: #{fwd.1} parent=11 // pred_check
        %p309 = pneg %p169
      $region34: #{fwd.1} parent=11 // pred_check_branch
        %311 = sbr.rel (%p309) target = $region36
      $region35: #{fwd.1} parent=11 // pred_region
        _
      $region36: #{fwd.1} parent=11 // pred_fallthru
        _
      // Predicated region
      $region37: #{fwd.1} parent=11 // pred_check
        %p312 = pneg %p190
      $region38: #{fwd.1} parent=11 // pred_check_branch
        %314 = sbr.rel (%p312) target = $region40
      $region39: #{fwd.1} parent=11 // pred_region
        _
      $region40: #{fwd.1} parent=11 // pred_fallthru
        _
      // Predicated region
      $region41: #{fwd.1} parent=11 // pred_check
        %p315 = pneg %p211
      $region42: #{fwd.1} parent=11 // pred_check_branch
        %317 = sbr.rel (%p315) target = $region44
      $region43: #{fwd.1} parent=11 // pred_region
        _
      $region44: #{fwd.1} parent=11 // pred_fallthru
        _
      // Predicated region
      $region45: #{fwd.1} parent=11 // pred_check
        %p318 = pneg %p232
      $region46: #{fwd.1} parent=11 // pred_check_branch
        %320 = sbr.rel (%p318) target = $region48
      $region47: #{fwd.1} parent=11 // pred_region
        _
      $region48: #{fwd.1} parent=11 // pred_fallthru
        _
      // Predicated region
      $region49: #{fwd.1} parent=11 // pred_check
        %p321 = pneg %p253
      $region50: #{fwd.1} parent=11 // pred_check_branch
        %323 = sbr.rel (%p321) target = $region52
      $region51: #{fwd.1} parent=11 // pred_region
        _
      $region52: #{fwd.1} parent=11 // pred_fallthru
        _
    $region12: #{fwd.1} parent=5 // pred_fallthru
      _
    %p324 = scmp.lt.s32.totalorder %s17, 2
    // Predicated region
    $region53: #{fwd.1} parent=5 // pred_check
      %p325 = pneg %p324
    $region54: #{fwd.1} parent=5 // pred_check_branch
      %327 = sbr.rel (%p325) target = $region56
    $region55: #{fwd.1} parent=5 // pred_region
      // Predicated region
      $region57: #{fwd.1} parent=55 // pred_check
        %p328 = pneg %p37
      $region58: #{fwd.1} parent=55 // pred_check_branch
        %330 = sbr.rel (%p328) target = $region60
      $region59: #{fwd.1} parent=55 // pred_region
        %p331 = scmp.lt.s32.totalorder %s17, 1
        %s332 = scalar_select %p331, %s17, 1
        %s333 = smul.addr %s332, 4
        %s334 = smul.addr %s333, 8
        %s335 = scalar_lea.vmem %s0, %s334
      $region60: #{fwd.1} parent=55 // pred_fallthru
        _
    $region56: #{fwd.1} parent=5 // pred_fallthru
      _
    %p336 = scmp.le.s32.totalorder 1, %s17
    %p337 = scmp.lt.s32.totalorder %s17, 3
    %p338 = pnand %p336, %p337
    %p339 = pneg %p338
    // Predicated region
    $region61: #{fwd.1} parent=5 // pred_check
      _
    $region62: #{fwd.1} parent=5 // pred_check_branch
      %341 = sbr.rel (%p338) target = $region64
    $region63: #{fwd.1} parent=5 // pred_region
      %s342 = ssub.s32 %s17, 1
      %p343 = scmp.lt.s32.totalorder %s22, 1
      %s344 = scalar_select %p343, %s22, 1
      %s345 = smul.addr %s344, 4
      %s346 = smul.addr %s345, 8
      %s347 = scalar_lea.vmem %s0, %s346
      %p348 = pneg %p43
      %p349 = pneg %p40
      %p350 = pneg %p64
      %p351 = pneg %p61
      %p352 = pneg %p85
      %p353 = pneg %p82
      %p354 = pneg %p106
      %p355 = pneg %p103
      %p356 = pneg %p127
      %p357 = pneg %p124
      %p358 = pneg %p148
      %p359 = pneg %p145
      %p360 = pneg %p169
      %p361 = pneg %p166
      %p362 = pneg %p190
      %p363 = pneg %p187
      %p364 = pneg %p211
      %p365 = pneg %p208
      %p366 = pneg %p232
      %p367 = pneg %p229
      %p368 = pneg %p253
      %p369 = pneg %p250
      %p370 = pneg %p279
      %p371 = pneg %p276
      %p372 = scmp.lt.s32.totalorder %s22, 1
      %s373 = scalar_select %p372, %s22, 1
      %s374 = smul.addr %s373, 2
      %s375 = smul.addr %s374, 8
      %s376 = scalar_lea.vmem %s11, %s375
      %p377 = scmp.lt.s32.totalorder %s22, 1
      %s378 = scalar_select %p377, %s22, 1
      %s379 = smul.addr %s378, 4
      %s380 = smul.addr %s379, 8
      %s381 = scalar_lea.vmem %s0, %s380
      %p382 = scmp.lt.s32.totalorder %s22, 1
      %s383 = scalar_select %p382, %s22, 1
      %s384 = smul.addr %s383, 2
      %s385 = smul.addr %s384, 8
      %s386 = scalar_lea.vmem %s11, %s385
      %v387 = vld [vmem:[%s381] sm:$0xff]
      %v388 = vld [vmem:[%s381 + $0x8] sm:$0xff]
      %v389 = vld [vmem:[%s381 + $0x10] sm:$0xff]
      %v390 = vld [vmem:[%s381 + $0x18] sm:$0xff]
      %v391 = vld [vmem:[%s1] sm:$0xff]
      %393 = vset.pattern.permute.xlu0 0
      %394 = vperm.xlu0 %393, %v391
      %v395 = vpop.permute.xlu0 %394
      %v397 = vlaneseq
      %v398 = vshrl.u32 %v397, 7
      %v399 = vsub.s32 0, %v398
      %v400 = vrot.slane %v387, %v399
      %v401 = vlaneseq
      %v402 = vshrl.u32 %v401, 7
      %v403 = vsub.s32 0, %v402
      %v404 = vrot.slane %v388, %v403
      %v405 = vmul.f32 %v395, %v400
      %v406 = vmul.f32 %v395, %v404
      %v407 = vadd.f32 %v405, 0.0
      %v408 = vadd.f32 %v406, 0.0
      %409 = vset.pattern.permute.xlu0 1
      %410 = vperm.xlu0 %409, %v391
      %v411 = vpop.permute.xlu0 %410
      %v413 = vlaneseq
      %v414 = vshrl.u32 %v413, 7
      %v415 = vsub.s32 1, %v414
      %v416 = vrot.slane %v387, %v415
      %v417 = vlaneseq
      %v418 = vshrl.u32 %v417, 7
      %v419 = vsub.s32 1, %v418
      %v420 = vrot.slane %v388, %v419
      %v421 = vmul.f32 %v411, %v416
      %v422 = vmul.f32 %v411, %v420
      %v423 = vadd.f32 %v407, %v421
      %v424 = vadd.f32 %v408, %v422
      %425 = vset.pattern.permute.xlu0 2
      %426 = vperm.xlu0 %425, %v391
      %v427 = vpop.permute.xlu0 %426
      %v429 = vlaneseq
      %v430 = vshrl.u32 %v429, 7
      %v431 = vsub.s32 2, %v430
      %v432 = vrot.slane %v387, %v431
      %v433 = vlaneseq
      %v434 = vshrl.u32 %v433, 7
      %v435 = vsub.s32 2, %v434
      %v436 = vrot.slane %v388, %v435
      %v437 = vmul.f32 %v427, %v432
      %v438 = vmul.f32 %v427, %v436
      %v439 = vadd.f32 %v423, %v437
      %v440 = vadd.f32 %v424, %v438
      %441 = vset.pattern.permute.xlu0 3
      %442 = vperm.xlu0 %441, %v391
      %v443 = vpop.permute.xlu0 %442
      %v445 = vlaneseq
      %v446 = vshrl.u32 %v445, 7
      %v447 = vsub.s32 3, %v446
      %v448 = vrot.slane %v387, %v447
      %v449 = vlaneseq
      %v450 = vshrl.u32 %v449, 7
      %v451 = vsub.s32 3, %v450
      %v452 = vrot.slane %v388, %v451
      %v453 = vmul.f32 %v443, %v448
      %v454 = vmul.f32 %v443, %v452
      %v455 = vadd.f32 %v439, %v453
      %v456 = vadd.f32 %v440, %v454
      %457 = vset.pattern.permute.xlu0 4
      %458 = vperm.xlu0 %457, %v391
      %v459 = vpop.permute.xlu0 %458
      %v461 = vlaneseq
      %v462 = vshrl.u32 %v461, 7
      %v463 = vsub.s32 4, %v462
      %v464 = vrot.slane %v387, %v463
      %v465 = vlaneseq
      %v466 = vshrl.u32 %v465, 7
      %v467 = vsub.s32 4, %v466
      %v468 = vrot.slane %v388, %v467
      %v469 = vmul.f32 %v459, %v464
      %v470 = vmul.f32 %v459, %v468
      %v471 = vadd.f32 %v455, %v469
      %v472 = vadd.f32 %v456, %v470
      %473 = vset.pattern.permute.xlu0 5
      %474 = vperm.xlu0 %473, %v391
      %v475 = vpop.permute.xlu0 %474
      %v477 = vlaneseq
      %v478 = vshrl.u32 %v477, 7
      %v479 = vsub.s32 5, %v478
      %v480 = vrot.slane %v387, %v479
      %v481 = vlaneseq
      %v482 = vshrl.u32 %v481, 7
      %v483 = vsub.s32 5, %v482
      %v484 = vrot.slane %v388, %v483
      %v485 = vmul.f32 %v475, %v480
      %v486 = vmul.f32 %v475, %v484
      %v487 = vadd.f32 %v471, %v485
      %v488 = vadd.f32 %v472, %v486
      %489 = vset.pattern.permute.xlu0 6
      %490 = vperm.xlu0 %489, %v391
      %v491 = vpop.permute.xlu0 %490
      %v493 = vlaneseq
      %v494 = vshrl.u32 %v493, 7
      %v495 = vsub.s32 6, %v494
      %v496 = vrot.slane %v387, %v495
      %v497 = vlaneseq
      %v498 = vshrl.u32 %v497, 7
      %v499 = vsub.s32 6, %v498
      %v500 = vrot.slane %v388, %v499
      %v501 = vmul.f32 %v491, %v496
      %v502 = vmul.f32 %v491, %v500
      %v503 = vadd.f32 %v487, %v501
      %v504 = vadd.f32 %v488, %v502
      %505 = vset.pattern.permute.xlu0 7
      %506 = vperm.xlu0 %505, %v391
      %v507 = vpop.permute.xlu0 %506
      %v509 = vlaneseq
      %v510 = vshrl.u32 %v509, 7
      %v511 = vsub.s32 7, %v510
      %v512 = vrot.slane %v387, %v511
      %v513 = vlaneseq
      %v514 = vshrl.u32 %v513, 7
      %v515 = vsub.s32 7, %v514
      %v516 = vrot.slane %v388, %v515
      %v517 = vmul.f32 %v507, %v512
      %v518 = vmul.f32 %v507, %v516
      %v519 = vadd.f32 %v503, %v517
      %v520 = vadd.f32 %v504, %v518
      %521 = vset.pattern.permute.xlu0 8
      %522 = vperm.xlu0 %521, %v391
      %v523 = vpop.permute.xlu0 %522
      %v525 = vlaneseq
      %v526 = vshrl.u32 %v525, 7
      %v527 = vsub.s32 0, %v526
      %v528 = vrot.slane %v389, %v527
      %v529 = vlaneseq
      %v530 = vshrl.u32 %v529, 7
      %v531 = vsub.s32 0, %v530
      %v532 = vrot.slane %v390, %v531
      %v533 = vmul.f32 %v523, %v528
      %v534 = vmul.f32 %v523, %v532
      %v535 = vadd.f32 %v519, %v533
      %v536 = vadd.f32 %v520, %v534
      %537 = vset.pattern.permute.xlu0 9
      %538 = vperm.xlu0 %537, %v391
      %v539 = vpop.permute.xlu0 %538
      %v541 = vlaneseq
      %v542 = vshrl.u32 %v541, 7
      %v543 = vsub.s32 1, %v542
      %v544 = vrot.slane %v389, %v543
      %v545 = vlaneseq
      %v546 = vshrl.u32 %v545, 7
      %v547 = vsub.s32 1, %v546
      %v548 = vrot.slane %v390, %v547
      %v549 = vmul.f32 %v539, %v544
      %v550 = vmul.f32 %v539, %v548
      %v551 = vadd.f32 %v535, %v549
      %v552 = vadd.f32 %v536, %v550
      %553 = vset.pattern.permute.xlu0 10
      %554 = vperm.xlu0 %553, %v391
      %v555 = vpop.permute.xlu0 %554
      %v557 = vlaneseq
      %v558 = vshrl.u32 %v557, 7
      %v559 = vsub.s32 2, %v558
      %v560 = vrot.slane %v389, %v559
      %v561 = vlaneseq
      %v562 = vshrl.u32 %v561, 7
      %v563 = vsub.s32 2, %v562
      %v564 = vrot.slane %v390, %v563
      %v565 = vmul.f32 %v555, %v560
      %v566 = vmul.f32 %v555, %v564
      %v567 = vadd.f32 %v551, %v565
      %v568 = vadd.f32 %v552, %v566
      %569 = vset.pattern.permute.xlu0 11
      %570 = vperm.xlu0 %569, %v391
      %v571 = vpop.permute.xlu0 %570
      %v573 = vlaneseq
      %v574 = vshrl.u32 %v573, 7
      %v575 = vsub.s32 3, %v574
      %v576 = vrot.slane %v389, %v575
      %v577 = vlaneseq
      %v578 = vshrl.u32 %v577, 7
      %v579 = vsub.s32 3, %v578
      %v580 = vrot.slane %v390, %v579
      %v581 = vmul.f32 %v571, %v576
      %v582 = vmul.f32 %v571, %v580
      %v583 = vadd.f32 %v567, %v581
      %v584 = vadd.f32 %v568, %v582
      %585 = vset.pattern.permute.xlu0 12
      %586 = vperm.xlu0 %585, %v391
      %v587 = vpop.permute.xlu0 %586
      %v589 = vlaneseq
      %v590 = vshrl.u32 %v589, 7
      %v591 = vsub.s32 4, %v590
      %v592 = vrot.slane %v389, %v591
      %v593 = vlaneseq
      %v594 = vshrl.u32 %v593, 7
      %v595 = vsub.s32 4, %v594
      %v596 = vrot.slane %v390, %v595
      %v597 = vmul.f32 %v587, %v592
      %v598 = vmul.f32 %v587, %v596
      %v599 = vadd.f32 %v583, %v597
      %v600 = vadd.f32 %v584, %v598
      %601 = vset.pattern.permute.xlu0 13
      %602 = vperm.xlu0 %601, %v391
      %v603 = vpop.permute.xlu0 %602
      %v605 = vlaneseq
      %v606 = vshrl.u32 %v605, 7
      %v607 = vsub.s32 5, %v606
      %v608 = vrot.slane %v389, %v607
      %v609 = vlaneseq
      %v610 = vshrl.u32 %v609, 7
      %v611 = vsub.s32 5, %v610
      %v612 = vrot.slane %v390, %v611
      %v613 = vmul.f32 %v603, %v608
      %v614 = vmul.f32 %v603, %v612
      %v615 = vadd.f32 %v599, %v613
      %v616 = vadd.f32 %v600, %v614
      %617 = vset.pattern.permute.xlu0 14
      %618 = vperm.xlu0 %617, %v391
      %v619 = vpop.permute.xlu0 %618
      %v621 = vlaneseq
      %v622 = vshrl.u32 %v621, 7
      %v623 = vsub.s32 6, %v622
      %v624 = vrot.slane %v389, %v623
      %v625 = vlaneseq
      %v626 = vshrl.u32 %v625, 7
      %v627 = vsub.s32 6, %v626
      %v628 = vrot.slane %v390, %v627
      %v629 = vmul.f32 %v619, %v624
      %v630 = vmul.f32 %v619, %v628
      %v631 = vadd.f32 %v615, %v629
      %v632 = vadd.f32 %v616, %v630
      %633 = vset.pattern.permute.xlu0 15
      %634 = vperm.xlu0 %633, %v391
      %v635 = vpop.permute.xlu0 %634
      %v637 = vlaneseq
      %v638 = vshrl.u32 %v637, 7
      %v639 = vsub.s32 7, %v638
      %v640 = vrot.slane %v389, %v639
      %v641 = vlaneseq
      %v642 = vshrl.u32 %v641, 7
      %v643 = vsub.s32 7, %v642
      %v644 = vrot.slane %v390, %v643
      %v645 = vmul.f32 %v635, %v640
      %v646 = vmul.f32 %v635, %v644
      %v647 = vadd.f32 %v631, %v645
      %v648 = vadd.f32 %v632, %v646
      %v649 = vmul.f32 %v395, %v464
      %v650 = vmul.f32 %v395, %v468
      %v651 = vadd.f32 %v649, 0.0
      %v652 = vadd.f32 %v650, 0.0
      %v653 = vmul.f32 %v411, %v480
      %v654 = vmul.f32 %v411, %v484
      %v655 = vadd.f32 %v651, %v653
      %v656 = vadd.f32 %v652, %v654
      %v657 = vmul.f32 %v427, %v496
      %v658 = vmul.f32 %v427, %v500
      %v659 = vadd.f32 %v655, %v657
      %v660 = vadd.f32 %v656, %v658
      %v661 = vmul.f32 %v443, %v512
      %v662 = vmul.f32 %v443, %v516
      %v663 = vadd.f32 %v659, %v661
      %v664 = vadd.f32 %v660, %v662
      %v665 = vmul.f32 %v459, %v528
      %v666 = vmul.f32 %v459, %v532
      %v667 = vadd.f32 %v663, %v665
      %v668 = vadd.f32 %v664, %v666
      %v669 = vmul.f32 %v475, %v544
      %v670 = vmul.f32 %v475, %v548
      %v671 = vadd.f32 %v667, %v669
      %v672 = vadd.f32 %v668, %v670
      %v673 = vmul.f32 %v491, %v560
      %v674 = vmul.f32 %v491, %v564
      %v675 = vadd.f32 %v671, %v673
      %v676 = vadd.f32 %v672, %v674
      %v677 = vmul.f32 %v507, %v576
      %v678 = vmul.f32 %v507, %v580
      %v679 = vadd.f32 %v675, %v677
      %v680 = vadd.f32 %v676, %v678
      %v681 = vmul.f32 %v523, %v592
      %v682 = vmul.f32 %v523, %v596
      %v683 = vadd.f32 %v679, %v681
      %v684 = vadd.f32 %v680, %v682
      %v685 = vmul.f32 %v539, %v608
      %v686 = vmul.f32 %v539, %v612
      %v687 = vadd.f32 %v683, %v685
      %v688 = vadd.f32 %v684, %v686
      %v689 = vmul.f32 %v555, %v624
      %v690 = vmul.f32 %v555, %v628
      %v691 = vadd.f32 %v687, %v689
      %v692 = vadd.f32 %v688, %v690
      %v693 = vmul.f32 %v571, %v640
      %v694 = vmul.f32 %v571, %v644
      %v695 = vadd.f32 %v691, %v693
      %v696 = vadd.f32 %v692, %v694
      %v697 = vmul.f32 %v587, %v400
      %v698 = vmul.f32 %v587, %v404
      %701 = vrot.lane.b32.xlu0 %v697, 127
      %v702 = vpop.permute.xlu0 %701
      %703 = vrot.lane.b32.xlu0 %v698, 127
      %v704 = vpop.permute.xlu0 %703
      %vm705 = vcmask 1039360
      %v706 = vsel %vm705, %v702, %v704
      %v709 = vadd.f32 %v695, %v706
      %v710 = vadd.f32 %v696, %v704
      %v711 = vmul.f32 %v603, %v416
      %v712 = vmul.f32 %v603, %v420
      %715 = vrot.lane.b32.xlu0 %v711, 127
      %v716 = vpop.permute.xlu0 %715
      %717 = vrot.lane.b32.xlu0 %v712, 127
      %v718 = vpop.permute.xlu0 %717
      %v719 = vsel %vm705, %v716, %v718
      %v722 = vadd.f32 %v709, %v719
      %v723 = vadd.f32 %v710, %v718
      %v724 = vmul.f32 %v619, %v432
      %v725 = vmul.f32 %v619, %v436
      %728 = vrot.lane.b32.xlu0 %v724, 127
      %v729 = vpop.permute.xlu0 %728
      %730 = vrot.lane.b32.xlu0 %v725, 127
      %v731 = vpop.permute.xlu0 %730
      %v732 = vsel %vm705, %v729, %v731
      %v735 = vadd.f32 %v722, %v732
      %v736 = vadd.f32 %v723, %v731
      %v737 = vmul.f32 %v635, %v448
      %v738 = vmul.f32 %v635, %v452
      %741 = vrot.lane.b32.xlu0 %v737, 127
      %v742 = vpop.permute.xlu0 %741
      %743 = vrot.lane.b32.xlu0 %v738, 127
      %v744 = vpop.permute.xlu0 %743
      %v745 = vsel %vm705, %v742, %v744
      %v748 = vadd.f32 %v735, %v745
      %v749 = vadd.f32 %v736, %v744
      %v750 = vmax.f32 %v647, %v748
      %v751 = vmax.f32 %v648, %v749
      %v752 = vmul.f32 %v395, %v528
      %v753 = vmul.f32 %v395, %v532
      %v754 = vadd.f32 %v752, 0.0
      %v755 = vadd.f32 %v753, 0.0
      %v756 = vmul.f32 %v411, %v544
      %v757 = vmul.f32 %v411, %v548
      %v758 = vadd.f32 %v754, %v756
      %v759 = vadd.f32 %v755, %v757
      %v760 = vmul.f32 %v427, %v560
      %v761 = vmul.f32 %v427, %v564
      %v762 = vadd.f32 %v758, %v760
      %v763 = vadd.f32 %v759, %v761
      %v764 = vmul.f32 %v443, %v576
      %v765 = vmul.f32 %v443, %v580
      %v766 = vadd.f32 %v762, %v764
      %v767 = vadd.f32 %v763, %v765
      %v768 = vmul.f32 %v459, %v592
      %v769 = vmul.f32 %v459, %v596
      %v770 = vadd.f32 %v766, %v768
      %v771 = vadd.f32 %v767, %v769
      %v772 = vmul.f32 %v475, %v608
      %v773 = vmul.f32 %v475, %v612
      %v774 = vadd.f32 %v770, %v772
      %v775 = vadd.f32 %v771, %v773
      %v776 = vmul.f32 %v491, %v624
      %v777 = vmul.f32 %v491, %v628
      %v778 = vadd.f32 %v774, %v776
      %v779 = vadd.f32 %v775, %v777
      %v780 = vmul.f32 %v507, %v640
      %v781 = vmul.f32 %v507, %v644
      %v782 = vadd.f32 %v778, %v780
      %v783 = vadd.f32 %v779, %v781
      %v784 = vmul.f32 %v523, %v400
      %v785 = vmul.f32 %v523, %v404
      %788 = vrot.lane.b32.xlu0 %v784, 127
      %v789 = vpop.permute.xlu0 %788
      %790 = vrot.lane.b32.xlu0 %v785, 127
      %v791 = vpop.permute.xlu0 %790
      %v792 = vsel %vm705, %v789, %v791
      %v795 = vadd.f32 %v782, %v792
      %v796 = vadd.f32 %v783, %v791
      %v797 = vmul.f32 %v539, %v416
      %v798 = vmul.f32 %v539, %v420
      %801 = vrot.lane.b32.xlu0 %v797, 127
      %v802 = vpop.permute.xlu0 %801
      %803 = vrot.lane.b32.xlu0 %v798, 127
      %v804 = vpop.permute.xlu0 %803
      %v805 = vsel %vm705, %v802, %v804
      %v808 = vadd.f32 %v795, %v805
      %v809 = vadd.f32 %v796, %v804
      %v810 = vmul.f32 %v555, %v432
      %v811 = vmul.f32 %v555, %v436
      %814 = vrot.lane.b32.xlu0 %v810, 127
      %v815 = vpop.permute.xlu0 %814
      %816 = vrot.lane.b32.xlu0 %v811, 127
      %v817 = vpop.permute.xlu0 %816
      %v818 = vsel %vm705, %v815, %v817
      %v821 = vadd.f32 %v808, %v818
      %v822 = vadd.f32 %v809, %v817
      %v823 = vmul.f32 %v571, %v448
      %v824 = vmul.f32 %v571, %v452
      %827 = vrot.lane.b32.xlu0 %v823, 127
      %v828 = vpop.permute.xlu0 %827
      %829 = vrot.lane.b32.xlu0 %v824, 127
      %v830 = vpop.permute.xlu0 %829
      %v831 = vsel %vm705, %v828, %v830
      %v834 = vadd.f32 %v821, %v831
      %v835 = vadd.f32 %v822, %v830
      %v836 = vmul.f32 %v587, %v464
      %v837 = vmul.f32 %v587, %v468
      %840 = vrot.lane.b32.xlu0 %v836, 127
      %v841 = vpop.permute.xlu0 %840
      %842 = vrot.lane.b32.xlu0 %v837, 127
      %v843 = vpop.permute.xlu0 %842
      %v844 = vsel %vm705, %v841, %v843
      %v847 = vadd.f32 %v834, %v844
      %v848 = vadd.f32 %v835, %v843
      %v849 = vmul.f32 %v603, %v480
      %v850 = vmul.f32 %v603, %v484
      %853 = vrot.lane.b32.xlu0 %v849, 127
      %v854 = vpop.permute.xlu0 %853
      %855 = vrot.lane.b32.xlu0 %v850, 127
      %v856 = vpop.permute.xlu0 %855
      %v857 = vsel %vm705, %v854, %v856
      %v860 = vadd.f32 %v847, %v857
      %v861 = vadd.f32 %v848, %v856
      %v862 = vmul.f32 %v619, %v496
      %v863 = vmul.f32 %v619, %v500
      %866 = vrot.lane.b32.xlu0 %v862, 127
      %v867 = vpop.permute.xlu0 %866
      %868 = vrot.lane.b32.xlu0 %v863, 127
      %v869 = vpop.permute.xlu0 %868
      %v870 = vsel %vm705, %v867, %v869
      %v873 = vadd.f32 %v860, %v870
      %v874 = vadd.f32 %v861, %v869
      %v875 = vmul.f32 %v635, %v512
      %v876 = vmul.f32 %v635, %v516
      %879 = vrot.lane.b32.xlu0 %v875, 127
      %v880 = vpop.permute.xlu0 %879
      %881 = vrot.lane.b32.xlu0 %v876, 127
      %v882 = vpop.permute.xlu0 %881
      %v883 = vsel %vm705, %v880, %v882
      %v886 = vadd.f32 %v873, %v883
      %v887 = vadd.f32 %v874, %v882
      %v888 = vmax.f32 %v750, %v886
      %v889 = vmax.f32 %v751, %v887
      %v890 = vmul.f32 %v395, %v592
      %v891 = vmul.f32 %v395, %v596
      %v892 = vadd.f32 %v890, 0.0
      %v893 = vadd.f32 %v891, 0.0
      %v894 = vmul.f32 %v411, %v608
      %v895 = vmul.f32 %v411, %v612
      %v896 = vadd.f32 %v892, %v894
      %v897 = vadd.f32 %v893, %v895
      %v898 = vmul.f32 %v427, %v624
      %v899 = vmul.f32 %v427, %v628
      %v900 = vadd.f32 %v896, %v898
      %v901 = vadd.f32 %v897, %v899
      %v902 = vmul.f32 %v443, %v640
      %v903 = vmul.f32 %v443, %v644
      %v904 = vadd.f32 %v900, %v902
      %v905 = vadd.f32 %v901, %v903
      %v906 = vmul.f32 %v459, %v400
      %v907 = vmul.f32 %v459, %v404
      %910 = vrot.lane.b32.xlu0 %v906, 127
      %v911 = vpop.permute.xlu0 %910
      %912 = vrot.lane.b32.xlu0 %v907, 127
      %v913 = vpop.permute.xlu0 %912
      %v914 = vsel %vm705, %v911, %v913
      %v917 = vadd.f32 %v904, %v914
      %v918 = vadd.f32 %v905, %v913
      %v919 = vmul.f32 %v475, %v416
      %v920 = vmul.f32 %v475, %v420
      %923 = vrot.lane.b32.xlu0 %v919, 127
      %v924 = vpop.permute.xlu0 %923
      %925 = vrot.lane.b32.xlu0 %v920, 127
      %v926 = vpop.permute.xlu0 %925
      %v927 = vsel %vm705, %v924, %v926
      %v930 = vadd.f32 %v917, %v927
      %v931 = vadd.f32 %v918, %v926
      %v932 = vmul.f32 %v491, %v432
      %v933 = vmul.f32 %v491, %v436
      %936 = vrot.lane.b32.xlu0 %v932, 127
      %v937 = vpop.permute.xlu0 %936
      %938 = vrot.lane.b32.xlu0 %v933, 127
      %v939 = vpop.permute.xlu0 %938
      %v940 = vsel %vm705, %v937, %v939
      %v943 = vadd.f32 %v930, %v940
      %v944 = vadd.f32 %v931, %v939
      %v945 = vmul.f32 %v507, %v448
      %v946 = vmul.f32 %v507, %v452
      %949 = vrot.lane.b32.xlu0 %v945, 127
      %v950 = vpop.permute.xlu0 %949
      %951 = vrot.lane.b32.xlu0 %v946, 127
      %v952 = vpop.permute.xlu0 %951
      %v953 = vsel %vm705, %v950, %v952
      %v956 = vadd.f32 %v943, %v953
      %v957 = vadd.f32 %v944, %v952
      %v958 = vmul.f32 %v523, %v464
      %v959 = vmul.f32 %v523, %v468
      %962 = vrot.lane.b32.xlu0 %v958, 127
      %v963 = vpop.permute.xlu0 %962
      %964 = vrot.lane.b32.xlu0 %v959, 127
      %v965 = vpop.permute.xlu0 %964
      %v966 = vsel %vm705, %v963, %v965
      %v969 = vadd.f32 %v956, %v966
      %v970 = vadd.f32 %v957, %v965
      %v971 = vmul.f32 %v539, %v480
      %v972 = vmul.f32 %v539, %v484
      %975 = vrot.lane.b32.xlu0 %v971, 127
      %v976 = vpop.permute.xlu0 %975
      %977 = vrot.lane.b32.xlu0 %v972, 127
      %v978 = vpop.permute.xlu0 %977
      %v979 = vsel %vm705, %v976, %v978
      %v982 = vadd.f32 %v969, %v979
      %v983 = vadd.f32 %v970, %v978
      %v984 = vmul.f32 %v555, %v496
      %v985 = vmul.f32 %v555, %v500
      %988 = vrot.lane.b32.xlu0 %v984, 127
      %v989 = vpop.permute.xlu0 %988
      %990 = vrot.lane.b32.xlu0 %v985, 127
      %v991 = vpop.permute.xlu0 %990
      %v992 = vsel %vm705, %v989, %v991
      %v995 = vadd.f32 %v982, %v992
      %v996 = vadd.f32 %v983, %v991
      %v997 = vmul.f32 %v571, %v512
      %v998 = vmul.f32 %v571, %v516
      %1001 = vrot.lane.b32.xlu0 %v997, 127
      %v1002 = vpop.permute.xlu0 %1001
      %1003 = vrot.lane.b32.xlu0 %v998, 127
      %v1004 = vpop.permute.xlu0 %1003
      %v1005 = vsel %vm705, %v1002, %v1004
      %v1008 = vadd.f32 %v995, %v1005
      %v1009 = vadd.f32 %v996, %v1004
      %v1010 = vmul.f32 %v587, %v528
      %v1011 = vmul.f32 %v587, %v532
      %1014 = vrot.lane.b32.xlu0 %v1010, 127
      %v1015 = vpop.permute.xlu0 %1014
      %1016 = vrot.lane.b32.xlu0 %v1011, 127
      %v1017 = vpop.permute.xlu0 %1016
      %v1018 = vsel %vm705, %v1015, %v1017
      %v1021 = vadd.f32 %v1008, %v1018
      %v1022 = vadd.f32 %v1009, %v1017
      %v1023 = vmul.f32 %v603, %v544
      %v1024 = vmul.f32 %v603, %v548
      %1027 = vrot.lane.b32.xlu0 %v1023, 127
      %v1028 = vpop.permute.xlu0 %1027
      %1029 = vrot.lane.b32.xlu0 %v1024, 127
      %v1030 = vpop.permute.xlu0 %1029
      %v1031 = vsel %vm705, %v1028, %v1030
      %v1034 = vadd.f32 %v1021, %v1031
      %v1035 = vadd.f32 %v1022, %v1030
      %v1036 = vmul.f32 %v619, %v560
      %v1037 = vmul.f32 %v619, %v564
      %1040 = vrot.lane.b32.xlu0 %v1036, 127
      %v1041 = vpop.permute.xlu0 %1040
      %1042 = vrot.lane.b32.xlu0 %v1037, 127
      %v1043 = vpop.permute.xlu0 %1042
      %v1044 = vsel %vm705, %v1041, %v1043
      %v1047 = vadd.f32 %v1034, %v1044
      %v1048 = vadd.f32 %v1035, %v1043
      %v1049 = vmul.f32 %v635, %v576
      %v1050 = vmul.f32 %v635, %v580
      %1053 = vrot.lane.b32.xlu0 %v1049, 127
      %v1054 = vpop.permute.xlu0 %1053
      %1055 = vrot.lane.b32.xlu0 %v1050, 127
      %v1056 = vpop.permute.xlu0 %1055
      %v1057 = vsel %vm705, %v1054, %v1056
      %v1060 = vadd.f32 %v1047, %v1057
      %v1061 = vadd.f32 %v1048, %v1056
      %v1062 = vmax.f32 %v888, %v1060
      %v1063 = vmax.f32 %v889, %v1061
      %v1064 = vld [vmem:[%s2] sm:$0xff]
      %1066 = vset.pattern.permute.xlu0 0
      %1067 = vperm.xlu0 %1066, %v1064
      %v1068 = vpop.permute.xlu0 %1067
      %v1070 = vadd.f32 %v1062, %v1068
      %v1071 = vadd.f32 %v1063, %v1068
      %v1072 = vmax.f32 %v1070, 0.0
      %v1073 = vmax.f32 %v1071, 0.0
      %1076 = vrot.lane.b32.xlu0 %v1072, 127
      %v1077 = vpop.permute.xlu0 %1076
      %1078 = vrot.lane.b32.xlu0 %v1073, 127
      %v1079 = vpop.permute.xlu0 %1078
      %v1080 = vsel %vm705, %v1077, %v1079
      %1083 = vrot.lane.b32.xlu0 %v1072, 126
      %v1084 = vpop.permute.xlu0 %1083
      %1085 = vrot.lane.b32.xlu0 %v1073, 126
      %v1086 = vpop.permute.xlu0 %1085
      %vm1087 = vcmask 1031168
      %v1088 = vsel %vm1087, %v1084, %v1086
      %v1091 = vld [vmem:[%s3] sm:$0xff]
      %v1092 = vld [vmem:[%s4] sm:$0xff]
      %1094 = vset.pattern.permute.xlu0 0
      %1095 = vperm.xlu0 %1094, %v1092
      %v1096 = vpop.permute.xlu0 %1095
      %vm1098 = vcmask 195584
      %v1100 = vsel %vm1098, %v1091, 0
      %1102 = vmatprep.subr.mxu0 0.0
      %1103 = vmatpush1.msra.mxu0 0.0
      %1104 = vmatprep.subr.mxu0 0.0
      %1105 = vmatpush1.msra.mxu0 0.0
      %1106 = vmatprep.subr.mxu0 0.0
      %1107 = vmatpush1.msra.mxu0 0.0
      %1108 = vmatprep.subr.mxu0 0.0
      %1109 = vmatpush1.msra.mxu0 0.0
      %1110 = vmatprep.subr.mxu0 0.0
      %1111 = vmatpush1.msra.mxu0 0.0
      %1112 = vmatprep.subr.mxu0 0.0
      %1113 = vmatpush1.msra.mxu0 0.0
      %1114 = vmatprep.subr.mxu0 0.0
      %1115 = vmatpush1.msra.mxu0 0.0
      %1116 = vmatprep.subr.mxu0 0.0
      %1117 = vmatpush1.msra.mxu0 0.0
      %1118 = vmatprep.subr.mxu0 0.0
      %1119 = vmatpush1.msra.mxu0 0.0
      %1120 = vmatprep.subr.mxu0 0.0
      %1121 = vmatpush1.msra.mxu0 0.0
      %1122 = vmatprep.subr.mxu0 0.0
      %1123 = vmatpush1.msra.mxu0 0.0
      %1124 = vmatprep.subr.mxu0 0.0
      %1125 = vmatpush1.msra.mxu0 0.0
      %1126 = vmatprep.subr.mxu0 0.0
      %1127 = vmatpush1.msra.mxu0 0.0
      %1128 = vmatprep.subr.mxu0 %v1086
      %1129 = vmatpush1.msra.mxu0 %v1088
      %1130 = vmatprep.subr.mxu0 %v1079
      %1131 = vmatpush1.msra.mxu0 %v1080
      %1132 = vmatprep.subr.mxu0 %v1073
      %1133 = vmatpush1.msra.mxu0 %v1072
      %1134 = vmatprep.subr.mxu0 0.0
      %1135 = vmatpush2.msra.mxu0 0.0
      %1136 = vmatprep.subr.mxu0 0.0
      %1137 = vmatpush2.msra.mxu0 0.0
      %1138 = vmatprep.subr.mxu0 0.0
      %1139 = vmatpush2.msra.mxu0 0.0
      %1140 = vmatprep.subr.mxu0 0.0
      %1141 = vmatpush2.msra.mxu0 0.0
      %1142 = vmatprep.subr.mxu0 0.0
      %1143 = vmatpush2.msra.mxu0 0.0
      %1144 = vmatprep.subr.mxu0 0.0
      %1145 = vmatpush2.msra.mxu0 0.0
      %1146 = vmatprep.subr.mxu0 0.0
      %1147 = vmatpush2.msra.mxu0 0.0
      %1148 = vmatprep.subr.mxu0 0.0
      %1149 = vmatpush2.msra.mxu0 0.0
      %1150 = vmatprep.subr.mxu0 0.0
      %1151 = vmatpush2.msra.mxu0 0.0
      %1152 = vmatprep.subr.mxu0 0.0
      %1153 = vmatpush2.msra.mxu0 0.0
      %1154 = vmatprep.subr.mxu0 0.0
      %1155 = vmatpush2.msra.mxu0 0.0
      %1156 = vmatprep.subr.mxu0 0.0
      %1157 = vmatpush2.msra.mxu0 0.0
      %1158 = vmatprep.subr.mxu0 0.0
      %1159 = vmatpush2.msra.mxu0 0.0
      %1160 = vmatprep.subr.mxu0 0.0
      %1161 = vmatpush2.msra.mxu0 0.0
      %1162 = vmatprep.subr.mxu0 0.0
      %1163 = vmatpush2.msra.mxu0 0.0
      %1164 = vmatprep.subr.mxu0 0.0
      %1165 = vmatpush2.msra.mxu0 0.0
      %1166 = vmatprep.mubr.f32.mxu0 0.0
      %1167 = vmatmul.mubr.f32.gmra.mxu0 %v1100
      %v1168 = vpop.f32.mrf.mxu0
      %v1169 = vadd.f32 %v1096, %v1168
      %v1170 = vpop.f32.mrf.mxu0
      %v1171 = vadd.f32 %v1096, %v1170
      %1172 = vdwg.mxu0
      %v1173 = vmax.f32 %v1169, 0.0
      %v1174 = vmax.f32 %v1171, 0.0
      %1177 = vrot.lane.b32.xlu0 %v1173, 127
      %v1178 = vpop.permute.xlu0 %1177
      %1179 = vrot.lane.b32.xlu0 %v1174, 127
      %v1180 = vpop.permute.xlu0 %1179
      %v1181 = vsel %vm705, %v1178, %v1180
      %v1184 = vmax.f32 %v1173, %v1181
      %v1185 = vmax.f32 %v1174, %v1180
      %1186 = vrot.lane.b32.xlu0 %v1173, 126
      %v1187 = vpop.permute.xlu0 %1186
      %1188 = vrot.lane.b32.xlu0 %v1174, 126
      %v1189 = vpop.permute.xlu0 %1188
      %v1190 = vsel %vm1087, %v1187, %v1189
      %v1193 = vmax.f32 %v1184, %v1190
      %v1194 = vmax.f32 %v1185, %v1189
      %1195 = vrot.lane.b32.xlu0 %v1173, 125
      %v1196 = vpop.permute.xlu0 %1195
      %1197 = vrot.lane.b32.xlu0 %v1174, 125
      %v1198 = vpop.permute.xlu0 %1197
      %vm1199 = vcmask 1022976
      %v1200 = vsel %vm1199, %v1196, %v1198
      %v1203 = vmax.f32 %v1193, %v1200
      %v1204 = vmax.f32 %v1194, %v1198
      %v1205 = vlaneseq
      %v1206 = vshrl.u32 %v1205, 7
      %v1207 = vadd.s32 %v1206, 8
      %v1208 = vadd.s32 %v1206, 16
      %v1209 = vadd.s32 %v1206, 24
      %v1210 = vadd.s32 %v1206, 32
      %v1211 = vadd.s32 %v1206, 40
      %v1212 = vadd.s32 %v1206, 48
      %v1213 = vadd.s32 %v1206, 56
      %v1214 = vadd.s32 %v1206, 64
      %v1215 = vadd.s32 %v1206, 72
      %v1216 = vadd.s32 %v1206, 80
      %v1217 = vadd.s32 %v1206, 88
      %v1218 = vadd.s32 %v1206, 96
      %v1219 = vadd.s32 %v1206, 104
      %v1220 = vadd.s32 %v1206, 112
      %v1221 = vadd.s32 %v1206, 120
      %v1222 = vadd.s32 %v1206, 128
      %v1223 = vadd.s32 %v1206, 136
      %v1224 = vadd.s32 %v1206, 144
      %v1225 = vadd.s32 %v1206, 152
      %v1226 = vadd.s32 %v1206, 160
      %v1227 = vadd.s32 %v1206, 168
      %v1228 = vadd.s32 %v1206, 176
      %v1229 = vadd.s32 %v1206, 184
      %v1230 = vadd.s32 %v1206, 192
      %v1231 = vadd.s32 %v1206, 200
      %v1232 = vadd.s32 %v1206, 208
      %v1233 = vadd.s32 %v1206, 216
      %v1234 = vadd.s32 %v1206, 224
      %v1235 = vadd.s32 %v1206, 232
      %v1236 = vadd.s32 %v1206, 240
      %v1237 = vadd.s32 %v1206, 248
      %v1238 = vlaneseq
      %v1239 = vand.u32 %v1238, 127
      %v1240 = vmul.u32 %v1239, 4
      %vm1241 = vcmp.eq.s32.totalorder %v1206, %v1240
      %vm1242 = vcmp.eq.s32.totalorder %v1207, %v1240
      %vm1243 = vcmp.eq.s32.totalorder %v1208, %v1240
      %vm1244 = vcmp.eq.s32.totalorder %v1209, %v1240
      %vm1245 = vcmp.eq.s32.totalorder %v1210, %v1240
      %vm1246 = vcmp.eq.s32.totalorder %v1211, %v1240
      %vm1247 = vcmp.eq.s32.totalorder %v1212, %v1240
      %vm1248 = vcmp.eq.s32.totalorder %v1213, %v1240
      %vm1249 = vcmp.eq.s32.totalorder %v1214, %v1240
      %vm1250 = vcmp.eq.s32.totalorder %v1215, %v1240
      %vm1251 = vcmp.eq.s32.totalorder %v1216, %v1240
      %vm1252 = vcmp.eq.s32.totalorder %v1217, %v1240
      %vm1253 = vcmp.eq.s32.totalorder %v1218, %v1240
      %vm1254 = vcmp.eq.s32.totalorder %v1219, %v1240
      %vm1255 = vcmp.eq.s32.totalorder %v1220, %v1240
      %vm1256 = vcmp.eq.s32.totalorder %v1221, %v1240
      %vm1257 = vcmp.eq.s32.totalorder %v1222, %v1240
      %vm1258 = vcmp.eq.s32.totalorder %v1223, %v1240
      %vm1259 = vcmp.eq.s32.totalorder %v1224, %v1240
      %vm1260 = vcmp.eq.s32.totalorder %v1225, %v1240
      %vm1261 = vcmp.eq.s32.totalorder %v1226, %v1240
      %vm1262 = vcmp.eq.s32.totalorder %v1227, %v1240
      %vm1263 = vcmp.eq.s32.totalorder %v1228, %v1240
      %vm1264 = vcmp.eq.s32.totalorder %v1229, %v1240
      %vm1265 = vcmp.eq.s32.totalorder %v1230, %v1240
      %vm1266 = vcmp.eq.s32.totalorder %v1231, %v1240
      %vm1267 = vcmp.eq.s32.totalorder %v1232, %v1240
      %vm1268 = vcmp.eq.s32.totalorder %v1233, %v1240
      %vm1269 = vcmp.eq.s32.totalorder %v1234, %v1240
      %vm1270 = vcmp.eq.s32.totalorder %v1235, %v1240
      %vm1271 = vcmp.eq.s32.totalorder %v1236, %v1240
      %vm1272 = vcmp.eq.s32.totalorder %v1237, %v1240
      %v1273 = vsel %vm1241, 1, 0
      %v1274 = vsel %vm1242, 1, 0
      %v1275 = vsel %vm1243, 1, 0
      %v1276 = vsel %vm1244, 1, 0
      %v1277 = vsel %vm1245, 1, 0
      %v1278 = vsel %vm1246, 1, 0
      %v1279 = vsel %vm1247, 1, 0
      %v1280 = vsel %vm1248, 1, 0
      %v1281 = vsel %vm1249, 1, 0
      %v1282 = vsel %vm1250, 1, 0
      %v1283 = vsel %vm1251, 1, 0
      %v1284 = vsel %vm1252, 1, 0
      %v1285 = vsel %vm1253, 1, 0
      %v1286 = vsel %vm1254, 1, 0
      %v1287 = vsel %vm1255, 1, 0
      %v1288 = vsel %vm1256, 1, 0
      %v1289 = vsel %vm1257, 1, 0
      %v1290 = vsel %vm1258, 1, 0
      %v1291 = vsel %vm1259, 1, 0
      %v1292 = vsel %vm1260, 1, 0
      %v1293 = vsel %vm1261, 1, 0
      %v1294 = vsel %vm1262, 1, 0
      %v1295 = vsel %vm1263, 1, 0
      %v1296 = vsel %vm1264, 1, 0
      %v1297 = vsel %vm1265, 1, 0
      %v1298 = vsel %vm1266, 1, 0
      %v1299 = vsel %vm1267, 1, 0
      %v1300 = vsel %vm1268, 1, 0
      %v1301 = vsel %vm1269, 1, 0
      %v1302 = vsel %vm1270, 1, 0
      %v1303 = vsel %vm1271, 1, 0
      %v1304 = vsel %vm1272, 1, 0
      %v1305 = vcvt.s32.f32 %v1273
      %v1306 = vcvt.s32.f32 %v1274
      %v1307 = vcvt.s32.f32 %v1275
      %v1308 = vcvt.s32.f32 %v1276
      %v1309 = vcvt.s32.f32 %v1277
      %v1310 = vcvt.s32.f32 %v1278
      %v1311 = vcvt.s32.f32 %v1279
      %v1312 = vcvt.s32.f32 %v1280
      %v1313 = vcvt.s32.f32 %v1281
      %v1314 = vcvt.s32.f32 %v1282
      %v1315 = vcvt.s32.f32 %v1283
      %v1316 = vcvt.s32.f32 %v1284
      %v1317 = vcvt.s32.f32 %v1285
      %v1318 = vcvt.s32.f32 %v1286
      %v1319 = vcvt.s32.f32 %v1287
      %v1320 = vcvt.s32.f32 %v1288
      %v1321 = vcvt.s32.f32 %v1289
      %v1322 = vcvt.s32.f32 %v1290
      %v1323 = vcvt.s32.f32 %v1291
      %v1324 = vcvt.s32.f32 %v1292
      %v1325 = vcvt.s32.f32 %v1293
      %v1326 = vcvt.s32.f32 %v1294
      %v1327 = vcvt.s32.f32 %v1295
      %v1328 = vcvt.s32.f32 %v1296
      %v1329 = vcvt.s32.f32 %v1297
      %v1330 = vcvt.s32.f32 %v1298
      %v1331 = vcvt.s32.f32 %v1299
      %v1332 = vcvt.s32.f32 %v1300
      %v1333 = vcvt.s32.f32 %v1301
      %v1334 = vcvt.s32.f32 %v1302
      %v1335 = vcvt.s32.f32 %v1303
      %v1336 = vcvt.s32.f32 %v1304
      %vm1337 = vcmask 998400
      %v1339 = vsel %vm1337, %v1204, 0
      %vm1341 = vcmask 1041408
      %v1343 = vsel %vm1341, %v1336, 0
      %1345 = vmatprep.subr.mxu0 0.0
      %1346 = vmatpush1.msra.mxu0 %v1320
      %1347 = vmatprep.subr.mxu0 0.0
      %1348 = vmatpush1.msra.mxu0 %v1319
      %1349 = vmatprep.subr.mxu0 0.0
      %1350 = vmatpush1.msra.mxu0 %v1318
      %1351 = vmatprep.subr.mxu0 0.0
      %1352 = vmatpush1.msra.mxu0 %v1317
      %1353 = vmatprep.subr.mxu0 0.0
      %1354 = vmatpush1.msra.mxu0 %v1316
      %1355 = vmatprep.subr.mxu0 0.0
      %1356 = vmatpush1.msra.mxu0 %v1315
      %1357 = vmatprep.subr.mxu0 0.0
      %1358 = vmatpush1.msra.mxu0 %v1314
      %1359 = vmatprep.subr.mxu0 0.0
      %1360 = vmatpush1.msra.mxu0 %v1313
      %1361 = vmatprep.subr.mxu0 0.0
      %1362 = vmatpush1.msra.mxu0 %v1312
      %1363 = vmatprep.subr.mxu0 0.0
      %1364 = vmatpush1.msra.mxu0 %v1311
      %1365 = vmatprep.subr.mxu0 0.0
      %1366 = vmatpush1.msra.mxu0 %v1310
      %1367 = vmatprep.subr.mxu0 0.0
      %1368 = vmatpush1.msra.mxu0 %v1309
      %1369 = vmatprep.subr.mxu0 0.0
      %1370 = vmatpush1.msra.mxu0 %v1308
      %1371 = vmatprep.subr.mxu0 0.0
      %1372 = vmatpush1.msra.mxu0 %v1307
      %1373 = vmatprep.subr.mxu0 0.0
      %1374 = vmatpush1.msra.mxu0 %v1306
      %1375 = vmatprep.subr.mxu0 0.0
      %1376 = vmatpush1.msra.mxu0 %v1305
      %1377 = vmatprep.subr.mxu0 0.0
      %1378 = vmatpush2.msra.mxu0 %v1343
      %1379 = vmatprep.subr.mxu0 0.0
      %1380 = vmatpush2.msra.mxu0 %v1335
      %1381 = vmatprep.subr.mxu0 0.0
      %1382 = vmatpush2.msra.mxu0 %v1334
      %1383 = vmatprep.subr.mxu0 0.0
      %1384 = vmatpush2.msra.mxu0 %v1333
      %1385 = vmatprep.subr.mxu0 0.0
      %1386 = vmatpush2.msra.mxu0 %v1332
      %1387 = vmatprep.subr.mxu0 0.0
      %1388 = vmatpush2.msra.mxu0 %v1331
      %1389 = vmatprep.subr.mxu0 0.0
      %1390 = vmatpush2.msra.mxu0 %v1330
      %1391 = vmatprep.subr.mxu0 0.0
      %1392 = vmatpush2.msra.mxu0 %v1329
      %1393 = vmatprep.subr.mxu0 0.0
      %1394 = vmatpush2.msra.mxu0 %v1328
      %1395 = vmatprep.subr.mxu0 0.0
      %1396 = vmatpush2.msra.mxu0 %v1327
      %1397 = vmatprep.subr.mxu0 0.0
      %1398 = vmatpush2.msra.mxu0 %v1326
      %1399 = vmatprep.subr.mxu0 0.0
      %1400 = vmatpush2.msra.mxu0 %v1325
      %1401 = vmatprep.subr.mxu0 0.0
      %1402 = vmatpush2.msra.mxu0 %v1324
      %1403 = vmatprep.subr.mxu0 0.0
      %1404 = vmatpush2.msra.mxu0 %v1323
      %1405 = vmatprep.subr.mxu0 0.0
      %1406 = vmatpush2.msra.mxu0 %v1322
      %1407 = vmatprep.subr.mxu0 0.0
      %1408 = vmatpush2.msra.mxu0 %v1321
      %1409 = vmatprep.mubr.f32.mxu0 %v1339
      %1410 = vmatmul.mubr.f32.gmra.mxu0 %v1203
      %v1411 = vpop.f32.mrf.mxu0
      %v1412 = vadd.f32 0.0, %v1411
      %v1413 = vpop.f32.mrf.mxu0
      %1414 = vdwg.mxu0
      %1416 = vrot.lane.b32.xlu0 %v1412, 127
      %v1417 = vpop.permute.xlu0 %1416
      %1419 = vrot.lane.b32.xlu0 %v1412, 126
      %v1420 = vpop.permute.xlu0 %1419
      %v1422 = vld [vmem:[%s5] sm:$0xff]
      %v1423 = vld [vmem:[%s5 + $0x8] sm:$0xff]
      %v1424 = vld [vmem:[%s6] sm:$0xff]
      %v1425 = vld [vmem:[%s6 + $0x8] sm:$0xff]
      %1427 = vset.pattern.permute.xlu0 0
      %1428 = vperm.xlu0 %1427, %v1424
      %v1429 = vpop.permute.xlu0 %1428
      %1432 = vset.pattern.permute.xlu0 0
      %1433 = vperm.xlu0 %1432, %v1425
      %v1434 = vpop.permute.xlu0 %1433
      %v1437 = vsel %vm1098, %v1422, 0
      %v1440 = vsel %vm1098, %v1423, 0
      %1442 = vmatprep.subr.mxu0 0.0
      %1443 = vmatpush1.msra.mxu0 0.0
      %1444 = vmatprep.subr.mxu0 0.0
      %1445 = vmatpush1.msra.mxu0 0.0
      %1446 = vmatprep.subr.mxu0 0.0
      %1447 = vmatpush1.msra.mxu0 0.0
      %1448 = vmatprep.subr.mxu0 0.0
      %1449 = vmatpush1.msra.mxu0 0.0
      %1450 = vmatprep.subr.mxu0 0.0
      %1451 = vmatpush1.msra.mxu0 0.0
      %1452 = vmatprep.subr.mxu0 0.0
      %1453 = vmatpush1.msra.mxu0 0.0
      %1454 = vmatprep.subr.mxu0 0.0
      %1455 = vmatpush1.msra.mxu0 0.0
      %1456 = vmatprep.subr.mxu0 0.0
      %1457 = vmatpush1.msra.mxu0 0.0
      %1458 = vmatprep.subr.mxu0 0.0
      %1459 = vmatpush1.msra.mxu0 0.0
      %1460 = vmatprep.subr.mxu0 0.0
      %1461 = vmatpush1.msra.mxu0 0.0
      %1462 = vmatprep.subr.mxu0 0.0
      %1463 = vmatpush1.msra.mxu0 0.0
      %1464 = vmatprep.subr.mxu0 0.0
      %1465 = vmatpush1.msra.mxu0 0.0
      %1466 = vmatprep.subr.mxu0 0.0
      %1467 = vmatpush1.msra.mxu0 0.0
      %1468 = vmatprep.subr.mxu0 0.0
      %1469 = vmatpush1.msra.mxu0 %v1420
      %1470 = vmatprep.subr.mxu0 0.0
      %1471 = vmatpush1.msra.mxu0 %v1417
      %1472 = vmatprep.subr.mxu0 0.0
      %1473 = vmatpush1.msra.mxu0 %v1412
      %1474 = vmatprep.subr.mxu0 0.0
      %1475 = vmatpush2.msra.mxu0 0.0
      %1476 = vmatprep.subr.mxu0 0.0
      %1477 = vmatpush2.msra.mxu0 0.0
      %1478 = vmatprep.subr.mxu0 0.0
      %1479 = vmatpush2.msra.mxu0 0.0
      %1480 = vmatprep.subr.mxu0 0.0
      %1481 = vmatpush2.msra.mxu0 0.0
      %1482 = vmatprep.subr.mxu0 0.0
      %1483 = vmatpush2.msra.mxu0 0.0
      %1484 = vmatprep.subr.mxu0 0.0
      %1485 = vmatpush2.msra.mxu0 0.0
      %1486 = vmatprep.subr.mxu0 0.0
      %1487 = vmatpush2.msra.mxu0 0.0
      %1488 = vmatprep.subr.mxu0 0.0
      %1489 = vmatpush2.msra.mxu0 0.0
      %1490 = vmatprep.subr.mxu0 0.0
      %1491 = vmatpush2.msra.mxu0 0.0
      %1492 = vmatprep.subr.mxu0 0.0
      %1493 = vmatpush2.msra.mxu0 0.0
      %1494 = vmatprep.subr.mxu0 0.0
      %1495 = vmatpush2.msra.mxu0 0.0
      %1496 = vmatprep.subr.mxu0 0.0
      %1497 = vmatpush2.msra.mxu0 0.0
      %1498 = vmatprep.subr.mxu0 0.0
      %1499 = vmatpush2.msra.mxu0 0.0
      %1500 = vmatprep.subr.mxu0 0.0
      %1501 = vmatpush2.msra.mxu0 0.0
      %1502 = vmatprep.subr.mxu0 0.0
      %1503 = vmatpush2.msra.mxu0 0.0
      %1504 = vmatprep.subr.mxu0 0.0
      %1505 = vmatpush2.msra.mxu0 0.0
      %1506 = vmatprep.mubr.f32.mxu0 0.0
      %1507 = vmatmul.mubr.f32.gmra.mxu0 %v1437
      %v1508 = vpop.f32.mrf.mxu0
      %v1509 = vadd.f32 %v1429, %v1508
      %v1510 = vpop.f32.mrf.mxu0
      %1511 = vmatprep.mubr.f32.mxu0 0.0
      %1512 = vmatmul.mubr.f32.gmra.mxu0 %v1440
      %v1513 = vpop.f32.mrf.mxu0
      %v1514 = vadd.f32 %v1434, %v1513
      %v1515 = vpop.f32.mrf.mxu0
      %1516 = vdwg.mxu0
      %v1517 = vmax.f32 %v1509, 0.0
      %v1518 = vmax.f32 %v1514, 0.0
      %1521 = vrot.lane.b32.xlu0 %v1517, 127
      %v1522 = vpop.permute.xlu0 %1521
      %1523 = vrot.lane.b32.xlu0 %v1518, 127
      %v1524 = vpop.permute.xlu0 %1523
      %v1527 = vmax.f32 %v1517, %v1522
      %v1528 = vmax.f32 %v1518, %v1524
      %1529 = vrot.lane.b32.xlu0 %v1517, 126
      %v1530 = vpop.permute.xlu0 %1529
      %1531 = vrot.lane.b32.xlu0 %v1518, 126
      %v1532 = vpop.permute.xlu0 %1531
      %v1535 = vmax.f32 %v1527, %v1530
      %v1536 = vmax.f32 %v1528, %v1532
      %1537 = vrot.lane.b32.xlu0 %v1517, 125
      %v1538 = vpop.permute.xlu0 %1537
      %1539 = vrot.lane.b32.xlu0 %v1518, 125
      %v1540 = vpop.permute.xlu0 %1539
      %v1543 = vmax.f32 %v1535, %v1538
      %v1544 = vmax.f32 %v1536, %v1540
      %vm1545 = vcmask 474112
      %v1547 = vsel %vm1545, %v1543, 0
      %v1550 = vsel %vm1545, %v1544, 0
      %v1553 = vsel %vm1341, %v1312, 0
      %1555 = vmatprep.subr.mxu0 0.0
      %1556 = vmatpush1.msra.mxu0 0.0
      %1557 = vmatprep.subr.mxu0 0.0
      %1558 = vmatpush1.msra.mxu0 0.0
      %1559 = vmatprep.subr.mxu0 0.0
      %1560 = vmatpush1.msra.mxu0 0.0
      %1561 = vmatprep.subr.mxu0 0.0
      %1562 = vmatpush1.msra.mxu0 0.0
      %1563 = vmatprep.subr.mxu0 0.0
      %1564 = vmatpush1.msra.mxu0 0.0
      %1565 = vmatprep.subr.mxu0 0.0
      %1566 = vmatpush1.msra.mxu0 0.0
      %1567 = vmatprep.subr.mxu0 0.0
      %1568 = vmatpush1.msra.mxu0 0.0
      %1569 = vmatprep.subr.mxu0 0.0
      %1570 = vmatpush1.msra.mxu0 0.0
      %1571 = vmatprep.subr.mxu0 0.0
      %1572 = vmatpush1.msra.mxu0 %v1553
      %1573 = vmatprep.subr.mxu0 0.0
      %1574 = vmatpush1.msra.mxu0 %v1311
      %1575 = vmatprep.subr.mxu0 0.0
      %1576 = vmatpush1.msra.mxu0 %v1310
      %1577 = vmatprep.subr.mxu0 0.0
      %1578 = vmatpush1.msra.mxu0 %v1309
      %1579 = vmatprep.subr.mxu0 0.0
      %1580 = vmatpush1.msra.mxu0 %v1308
      %1581 = vmatprep.subr.mxu0 0.0
      %1582 = vmatpush1.msra.mxu0 %v1307
      %1583 = vmatprep.subr.mxu0 0.0
      %1584 = vmatpush1.msra.mxu0 %v1306
      %1585 = vmatprep.subr.mxu0 0.0
      %1586 = vmatpush1.msra.mxu0 %v1305
      %1587 = vmatprep.subr.mxu0 0.0
      %1588 = vmatpush2.msra.mxu0 0.0
      %1589 = vmatprep.subr.mxu0 0.0
      %1590 = vmatpush2.msra.mxu0 0.0
      %1591 = vmatprep.subr.mxu0 0.0
      %1592 = vmatpush2.msra.mxu0 0.0
      %1593 = vmatprep.subr.mxu0 0.0
      %1594 = vmatpush2.msra.mxu0 0.0
      %1595 = vmatprep.subr.mxu0 0.0
      %1596 = vmatpush2.msra.mxu0 0.0
      %1597 = vmatprep.subr.mxu0 0.0
      %1598 = vmatpush2.msra.mxu0 0.0
      %1599 = vmatprep.subr.mxu0 0.0
      %1600 = vmatpush2.msra.mxu0 0.0
      %1601 = vmatprep.subr.mxu0 0.0
      %1602 = vmatpush2.msra.mxu0 0.0
      %1603 = vmatprep.subr.mxu0 0.0
      %1604 = vmatpush2.msra.mxu0 0.0
      %1605 = vmatprep.subr.mxu0 0.0
      %1606 = vmatpush2.msra.mxu0 0.0
      %1607 = vmatprep.subr.mxu0 0.0
      %1608 = vmatpush2.msra.mxu0 0.0
      %1609 = vmatprep.subr.mxu0 0.0
      %1610 = vmatpush2.msra.mxu0 0.0
      %1611 = vmatprep.subr.mxu0 0.0
      %1612 = vmatpush2.msra.mxu0 0.0
      %1613 = vmatprep.subr.mxu0 0.0
      %1614 = vmatpush2.msra.mxu0 0.0
      %1615 = vmatprep.subr.mxu0 0.0
      %1616 = vmatpush2.msra.mxu0 0.0
      %1617 = vmatprep.subr.mxu0 0.0
      %1618 = vmatpush2.msra.mxu0 0.0
      %1619 = vmatprep.mubr.f32.mxu0 0.0
      %1620 = vmatmul.mubr.f32.gmra.mxu0 %v1547
      %v1621 = vpop.f32.mrf.mxu0
      %v1622 = vadd.f32 0.0, %v1621
      %v1623 = vpop.f32.mrf.mxu0
      %1624 = vmatprep.mubr.f32.mxu0 0.0
      %1625 = vmatmul.mubr.f32.gmra.mxu0 %v1550
      %v1626 = vpop.f32.mrf.mxu0
      %v1627 = vadd.f32 0.0, %v1626
      %v1628 = vpop.f32.mrf.mxu0
      %1629 = vdwg.mxu0
      %1632 = vrot.lane.b32.xlu0 %v1622, 127
      %v1633 = vpop.permute.xlu0 %1632
      %1634 = vrot.lane.b32.xlu0 %v1627, 127
      %v1635 = vpop.permute.xlu0 %1634
      %1638 = vrot.lane.b32.xlu0 %v1622, 126
      %v1639 = vpop.permute.xlu0 %1638
      %1640 = vrot.lane.b32.xlu0 %v1627, 126
      %v1641 = vpop.permute.xlu0 %1640
      %v1644 = vld [vmem:[%s7] sm:$0xff]
      %v1645 = vld [vmem:[%s7 + $0x8] sm:$0xff]
      %v1646 = vld [vmem:[%s8] sm:$0xff]
      %v1647 = vld [vmem:[%s8 + $0x8] sm:$0xff]
      %1649 = vset.pattern.permute.xlu0 0
      %1650 = vperm.xlu0 %1649, %v1646
      %v1651 = vpop.permute.xlu0 %1650
      %1654 = vset.pattern.permute.xlu0 0
      %1655 = vperm.xlu0 %1654, %v1647
      %v1656 = vpop.permute.xlu0 %1655
      %vm1658 = vcmask 392192
      %v1660 = vsel %vm1658, %v1644, 0
      %v1663 = vsel %vm1658, %v1645, 0
      %1665 = vmatprep.subr.mxu0 0.0
      %1666 = vmatpush1.msra.mxu0 0.0
      %1667 = vmatprep.subr.mxu0 0.0
      %1668 = vmatpush1.msra.mxu0 0.0
      %1669 = vmatprep.subr.mxu0 0.0
      %1670 = vmatpush1.msra.mxu0 0.0
      %1671 = vmatprep.subr.mxu0 0.0
      %1672 = vmatpush1.msra.mxu0 0.0
      %1673 = vmatprep.subr.mxu0 0.0
      %1674 = vmatpush1.msra.mxu0 0.0
      %1675 = vmatprep.subr.mxu0 0.0
      %1676 = vmatpush1.msra.mxu0 0.0
      %1677 = vmatprep.subr.mxu0 0.0
      %1678 = vmatpush1.msra.mxu0 0.0
      %1679 = vmatprep.subr.mxu0 0.0
      %1680 = vmatpush1.msra.mxu0 0.0
      %1681 = vmatprep.subr.mxu0 0.0
      %1682 = vmatpush1.msra.mxu0 0.0
      %1683 = vmatprep.subr.mxu0 0.0
      %1684 = vmatpush1.msra.mxu0 0.0
      %1685 = vmatprep.subr.mxu0 0.0
      %1686 = vmatpush1.msra.mxu0 %v1641
      %1687 = vmatprep.subr.mxu0 0.0
      %1688 = vmatpush1.msra.mxu0 %v1639
      %1689 = vmatprep.subr.mxu0 0.0
      %1690 = vmatpush1.msra.mxu0 %v1635
      %1691 = vmatprep.subr.mxu0 0.0
      %1692 = vmatpush1.msra.mxu0 %v1633
      %1693 = vmatprep.subr.mxu0 0.0
      %1694 = vmatpush1.msra.mxu0 %v1627
      %1695 = vmatprep.subr.mxu0 0.0
      %1696 = vmatpush1.msra.mxu0 %v1622
      %1697 = vmatprep.subr.mxu0 0.0
      %1698 = vmatpush2.msra.mxu0 0.0
      %1699 = vmatprep.subr.mxu0 0.0
      %1700 = vmatpush2.msra.mxu0 0.0
      %1701 = vmatprep.subr.mxu0 0.0
      %1702 = vmatpush2.msra.mxu0 0.0
      %1703 = vmatprep.subr.mxu0 0.0
      %1704 = vmatpush2.msra.mxu0 0.0
      %1705 = vmatprep.subr.mxu0 0.0
      %1706 = vmatpush2.msra.mxu0 0.0
      %1707 = vmatprep.subr.mxu0 0.0
      %1708 = vmatpush2.msra.mxu0 0.0
      %1709 = vmatprep.subr.mxu0 0.0
      %1710 = vmatpush2.msra.mxu0 0.0
      %1711 = vmatprep.subr.mxu0 0.0
      %1712 = vmatpush2.msra.mxu0 0.0
      %1713 = vmatprep.subr.mxu0 0.0
      %1714 = vmatpush2.msra.mxu0 0.0
      %1715 = vmatprep.subr.mxu0 0.0
      %1716 = vmatpush2.msra.mxu0 0.0
      %1717 = vmatprep.subr.mxu0 0.0
      %1718 = vmatpush2.msra.mxu0 0.0
      %1719 = vmatprep.subr.mxu0 0.0
      %1720 = vmatpush2.msra.mxu0 0.0
      %1721 = vmatprep.subr.mxu0 0.0
      %1722 = vmatpush2.msra.mxu0 0.0
      %1723 = vmatprep.subr.mxu0 0.0
      %1724 = vmatpush2.msra.mxu0 0.0
      %1725 = vmatprep.subr.mxu0 0.0
      %1726 = vmatpush2.msra.mxu0 0.0
      %1727 = vmatprep.subr.mxu0 0.0
      %1728 = vmatpush2.msra.mxu0 0.0
      %1729 = vmatprep.mubr.f32.mxu0 0.0
      %1730 = vmatmul.mubr.f32.gmra.mxu0 %v1660
      %v1731 = vpop.f32.mrf.mxu0
      %v1732 = vadd.f32 %v1651, %v1731
      %v1733 = vpop.f32.mrf.mxu0
      %1734 = vmatprep.mubr.f32.mxu0 0.0
      %1735 = vmatmul.mubr.f32.gmra.mxu0 %v1663
      %v1736 = vpop.f32.mrf.mxu0
      %v1737 = vadd.f32 %v1656, %v1736
      %v1738 = vpop.f32.mrf.mxu0
      %1739 = vdwg.mxu0
      %v1740 = vmax.f32 %v1732, 0.0
      %v1741 = vmax.f32 %v1737, 0.0
      %1744 = vrot.lane.b32.xlu0 %v1740, 127
      %v1745 = vpop.permute.xlu0 %1744
      %1746 = vrot.lane.b32.xlu0 %v1741, 127
      %v1747 = vpop.permute.xlu0 %1746
      %v1750 = vmax.f32 %v1740, %v1745
      %v1751 = vmax.f32 %v1741, %v1747
      %1752 = vrot.lane.b32.xlu0 %v1740, 126
      %v1753 = vpop.permute.xlu0 %1752
      %1754 = vrot.lane.b32.xlu0 %v1741, 126
      %v1755 = vpop.permute.xlu0 %1754
      %v1758 = vmax.f32 %v1750, %v1753
      %v1759 = vmax.f32 %v1751, %v1755
      %1760 = vrot.lane.b32.xlu0 %v1740, 125
      %v1761 = vpop.permute.xlu0 %1760
      %1762 = vrot.lane.b32.xlu0 %v1741, 125
      %v1763 = vpop.permute.xlu0 %1762
      %v1766 = vmax.f32 %v1758, %v1761
      %v1767 = vmax.f32 %v1759, %v1763
      %vm1768 = vcmask 80896
      %v1770 = vsel %vm1768, %v1766, 0
      %v1773 = vsel %vm1768, %v1767, 0
      %v1776 = vsel %vm1341, %v1306, 0
      %1778 = vmatprep.subr.mxu0 0.0
      %1779 = vmatpush1.msra.mxu0 0.0
      %1780 = vmatprep.subr.mxu0 0.0
      %1781 = vmatpush1.msra.mxu0 0.0
      %1782 = vmatprep.subr.mxu0 0.0
      %1783 = vmatpush1.msra.mxu0 0.0
      %1784 = vmatprep.subr.mxu0 0.0
      %1785 = vmatpush1.msra.mxu0 0.0
      %1786 = vmatprep.subr.mxu0 0.0
      %1787 = vmatpush1.msra.mxu0 0.0
      %1788 = vmatprep.subr.mxu0 0.0
      %1789 = vmatpush1.msra.mxu0 0.0
      %1790 = vmatprep.subr.mxu0 0.0
      %1791 = vmatpush1.msra.mxu0 0.0
      %1792 = vmatprep.subr.mxu0 0.0
      %1793 = vmatpush1.msra.mxu0 0.0
      %1794 = vmatprep.subr.mxu0 0.0
      %1795 = vmatpush1.msra.mxu0 0.0
      %1796 = vmatprep.subr.mxu0 0.0
      %1797 = vmatpush1.msra.mxu0 0.0
      %1798 = vmatprep.subr.mxu0 0.0
      %1799 = vmatpush1.msra.mxu0 0.0
      %1800 = vmatprep.subr.mxu0 0.0
      %1801 = vmatpush1.msra.mxu0 0.0
      %1802 = vmatprep.subr.mxu0 0.0
      %1803 = vmatpush1.msra.mxu0 0.0
      %1804 = vmatprep.subr.mxu0 0.0
      %1805 = vmatpush1.msra.mxu0 0.0
      %1806 = vmatprep.subr.mxu0 0.0
      %1807 = vmatpush1.msra.mxu0 %v1776
      %1808 = vmatprep.subr.mxu0 0.0
      %1809 = vmatpush1.msra.mxu0 %v1305
      %1810 = vmatprep.subr.mxu0 0.0
      %1811 = vmatpush2.msra.mxu0 0.0
      %1812 = vmatprep.subr.mxu0 0.0
      %1813 = vmatpush2.msra.mxu0 0.0
      %1814 = vmatprep.subr.mxu0 0.0
      %1815 = vmatpush2.msra.mxu0 0.0
      %1816 = vmatprep.subr.mxu0 0.0
      %1817 = vmatpush2.msra.mxu0 0.0
      %1818 = vmatprep.subr.mxu0 0.0
      %1819 = vmatpush2.msra.mxu0 0.0
      %1820 = vmatprep.subr.mxu0 0.0
      %1821 = vmatpush2.msra.mxu0 0.0
      %1822 = vmatprep.subr.mxu0 0.0
      %1823 = vmatpush2.msra.mxu0 0.0
      %1824 = vmatprep.subr.mxu0 0.0
      %1825 = vmatpush2.msra.mxu0 0.0
      %1826 = vmatprep.subr.mxu0 0.0
      %1827 = vmatpush2.msra.mxu0 0.0
      %1828 = vmatprep.subr.mxu0 0.0
      %1829 = vmatpush2.msra.mxu0 0.0
      %1830 = vmatprep.subr.mxu0 0.0
      %1831 = vmatpush2.msra.mxu0 0.0
      %1832 = vmatprep.subr.mxu0 0.0
      %1833 = vmatpush2.msra.mxu0 0.0
      %1834 = vmatprep.subr.mxu0 0.0
      %1835 = vmatpush2.msra.mxu0 0.0
      %1836 = vmatprep.subr.mxu0 0.0
      %1837 = vmatpush2.msra.mxu0 0.0
      %1838 = vmatprep.subr.mxu0 0.0
      %1839 = vmatpush2.msra.mxu0 0.0
      %1840 = vmatprep.subr.mxu0 0.0
      %1841 = vmatpush2.msra.mxu0 0.0
      %1842 = vmatprep.mubr.f32.mxu0 0.0
      %1843 = vmatmul.mubr.f32.gmra.mxu0 %v1770
      %v1844 = vpop.f32.mrf.mxu0
      %v1845 = vadd.f32 0.0, %v1844
      %v1846 = vpop.f32.mrf.mxu0
      %1847 = vmatprep.mubr.f32.mxu0 0.0
      %1848 = vmatmul.mubr.f32.gmra.mxu0 %v1773
      %v1849 = vpop.f32.mrf.mxu0
      %v1850 = vadd.f32 0.0, %v1849
      %v1851 = vpop.f32.mrf.mxu0
      %1852 = vdwg.mxu0
      %v1853 = vld [vmem:[%s9] sm:$0xff]
      %v1854 = vld [vmem:[%s9 + $0x8] sm:$0x3]
      %vm1855 = vcmask 130048
      %v1857 = vsel %vm1855, %v1853, 0
      %v1860 = vsel %vm1855, %v1854, 0
      %1862 = vmatprep.subr.mxu0 0.0
      %1863 = vmatpush1.msra.mxu0 0.0
      %1864 = vmatprep.subr.mxu0 0.0
      %1865 = vmatpush1.msra.mxu0 0.0
      %1866 = vmatprep.subr.mxu0 0.0
      %1867 = vmatpush1.msra.mxu0 0.0
      %1868 = vmatprep.subr.mxu0 0.0
      %1869 = vmatpush1.msra.mxu0 0.0
      %1870 = vmatprep.subr.mxu0 0.0
      %1871 = vmatpush1.msra.mxu0 0.0
      %1872 = vmatprep.subr.mxu0 0.0
      %1873 = vmatpush1.msra.mxu0 0.0
      %1874 = vmatprep.subr.mxu0 0.0
      %1875 = vmatpush1.msra.mxu0 0.0
      %1876 = vmatprep.subr.mxu0 0.0
      %1877 = vmatpush1.msra.mxu0 0.0
      %1878 = vmatprep.subr.mxu0 0.0
      %1879 = vmatpush1.msra.mxu0 0.0
      %1880 = vmatprep.subr.mxu0 0.0
      %1881 = vmatpush1.msra.mxu0 0.0
      %1882 = vmatprep.subr.mxu0 0.0
      %1883 = vmatpush1.msra.mxu0 0.0
      %1884 = vmatprep.subr.mxu0 0.0
      %1885 = vmatpush1.msra.mxu0 0.0
      %1886 = vmatprep.subr.mxu0 0.0
      %1887 = vmatpush1.msra.mxu0 0.0
      %1888 = vmatprep.subr.mxu0 0.0
      %1889 = vmatpush1.msra.mxu0 0.0
      %1890 = vmatprep.subr.mxu0 0.0
      %1891 = vmatpush1.msra.mxu0 %v1850
      %1892 = vmatprep.subr.mxu0 0.0
      %1893 = vmatpush1.msra.mxu0 %v1845
      %1894 = vmatprep.subr.mxu0 0.0
      %1895 = vmatpush2.msra.mxu0 0.0
      %1896 = vmatprep.subr.mxu0 0.0
      %1897 = vmatpush2.msra.mxu0 0.0
      %1898 = vmatprep.subr.mxu0 0.0
      %1899 = vmatpush2.msra.mxu0 0.0
      %1900 = vmatprep.subr.mxu0 0.0
      %1901 = vmatpush2.msra.mxu0 0.0
      %1902 = vmatprep.subr.mxu0 0.0
      %1903 = vmatpush2.msra.mxu0 0.0
      %1904 = vmatprep.subr.mxu0 0.0
      %1905 = vmatpush2.msra.mxu0 0.0
      %1906 = vmatprep.subr.mxu0 0.0
      %1907 = vmatpush2.msra.mxu0 0.0
      %1908 = vmatprep.subr.mxu0 0.0
      %1909 = vmatpush2.msra.mxu0 0.0
      %1910 = vmatprep.subr.mxu0 0.0
      %1911 = vmatpush2.msra.mxu0 0.0
      %1912 = vmatprep.subr.mxu0 0.0
      %1913 = vmatpush2.msra.mxu0 0.0
      %1914 = vmatprep.subr.mxu0 0.0
      %1915 = vmatpush2.msra.mxu0 0.0
      %1916 = vmatprep.subr.mxu0 0.0
      %1917 = vmatpush2.msra.mxu0 0.0
      %1918 = vmatprep.subr.mxu0 0.0
      %1919 = vmatpush2.msra.mxu0 0.0
      %1920 = vmatprep.subr.mxu0 0.0
      %1921 = vmatpush2.msra.mxu0 0.0
      %1922 = vmatprep.subr.mxu0 0.0
      %1923 = vmatpush2.msra.mxu0 0.0
      %1924 = vmatprep.subr.mxu0 0.0
      %1925 = vmatpush2.msra.mxu0 0.0
      %1926 = vmatprep.mubr.f32.mxu0 0.0
      %1927 = vmatmul.mubr.f32.gmra.mxu0 %v1857
      %v1928 = vpop.f32.mrf.mxu0
      %v1929 = vadd.f32 0.0, %v1928
      %v1930 = vpop.f32.mrf.mxu0
      %1931 = vmatprep.mubr.f32.mxu0 0.0
      %1932 = vmatmul.mubr.f32.gmra.mxu0 %v1860
      %v1933 = vpop.f32.mrf.mxu0
      %v1934 = vadd.f32 0.0, %v1933
      %v1935 = vpop.f32.mrf.mxu0
      %1936 = vdwg.mxu0
      %vm1937 = vcmask 23552
      %v1938 = vsel %vm1937, %v1929, 0.0
      %1939 = vadd.xlane.f32.xlu0 %v1938
      %v1940 = vpop.xlane.xlu0 %1939
      %vm1941 = vcmask 17408
      %v1942 = vsel %vm1941, %v1934, 0.0
      %1943 = vadd.xlane.f32.xlu0 %v1942
      %v1944 = vpop.xlane.xlu0 %1943
      %v1945 = vrcp.pop 3.0
      %v1946 = vmul.f32 %v1940, %v1945
      %v1947 = vmul.f32 %v1944, %v1945
      %v1948 = vld [vmem:[%s10] sm:$0xff]
      %v1949 = vld [vmem:[%s10 + $0x8] sm:$0x3]
      %v1950 = vadd.f32 %v1946, %v1948
      %v1951 = vadd.f32 %v1947, %v1949
      %vm1952 = vcmask 7168
      %v1953 = vsel %vm1952, %v1950, -inf
      %vm1954 = vcmask 1024
      %v1955 = vsel %vm1954, %v1951, -inf
      %v1956 = vmax.f32 %v1953, %v1955
      %v1957 = vrot.slane %v1956, 4
      %v1958 = vmax.f32 %v1956, %v1957
      %v1959 = vrot.slane %v1958, 2
      %v1960 = vmax.f32 %v1958, %v1959
      %v1961 = vrot.slane %v1960, 1
      %v1962 = vmax.f32 %v1960, %v1961
      %v1963 = vsub.f32 %v1950, %v1962
      %v1964 = vsub.f32 %v1951, %v1962
      %v1965 = vmul.f32 %v1963, 1.442695
      %v1966 = vpow.pop %v1965
      %v1967 = vmul.f32 %v1964, 1.442695
      %v1968 = vpow.pop %v1967
      %v1969 = vsel %vm1952, %v1966, 0.0
      %v1970 = vsel %vm1954, %v1968, 0.0
      %v1971 = vadd.f32 %v1969, %v1970
      %v1972 = vrot.slane %v1971, 4
      %v1973 = vadd.f32 %v1971, %v1972
      %v1974 = vrot.slane %v1973, 2
      %v1975 = vadd.f32 %v1973, %v1974
      %v1976 = vrot.slane %v1975, 1
      %v1977 = vadd.f32 %v1975, %v1976
      %v1978 = vlog2.pop %v1977
      %v1979 = vmul.f32 %v1978, 0.6931472
      %v1980 = vsub.f32 %v1963, %v1979
      %v1981 = vsub.f32 %v1964, %v1979
      %1982 = vst.msk [vmem:[%s386] sm:$0xff] %vm1952, %v1980
      %1983 = vst.msk [vmem:[%s386 + $0x8] sm:$0x3] %vm1954, %v1981
      %p1984 = scmp.lt.s32.totalorder %s22, 1
      %s1985 = scalar_select %p1984, %s22, 1
      %s1986 = smul.addr %s1985, 2
      %s1987 = smul.addr %s1986, 8
      %s1988 = scalar_lea.vmem %s11, %s1987
      // Predicated region
      $region65: #{fwd.1} parent=63 // pred_check
        %p1989 = pneg %p276
      $region66: #{fwd.1} parent=63 // pred_check_branch
        %1991 = sbr.rel (%p1989) target = $region68
      $region67: #{fwd.1} parent=63 // pred_region
        _
      $region68: #{fwd.1} parent=63 // pred_fallthru
        _
    $region64: #{fwd.1} parent=5 // pred_fallthru
      _
    %p1992 = scmp.le.s32.totalorder 2, %s17
    // Predicated region
    $region69: #{fwd.1} parent=5 // pred_check
      %p1993 = pneg %p1992
    $region70: #{fwd.1} parent=5 // pred_check_branch
      %1995 = sbr.rel (%p1993) target = $region72
    $region71: #{fwd.1} parent=5 // pred_region
      %s1996 = ssub.s32 %s17, 2
      // Predicated region
      $region73: #{fwd.1} parent=71 // pred_check
        %p1997 = pneg %p282
      $region74: #{fwd.1} parent=71 // pred_check_branch
        %1999 = sbr.rel (%p1997) target = $region76
      $region75: #{fwd.1} parent=71 // pred_region
        %p2000 = scmp.lt.s32.totalorder %s23, 1
        %s2001 = scalar_select %p2000, %s23, 1
        %s2002 = smul.addr %s2001, 2
        %s2003 = smul.addr %s2002, 8
        %s2004 = scalar_lea.vmem %s11, %s2003
      $region76: #{fwd.1} parent=71 // pred_fallthru
        _
    $region72: #{fwd.1} parent=5 // pred_fallthru
      _
  $region6: #{fwd.1} parent=0 // loop_footer
    %s21 = sadd.s32 1, %s17
  $region7: #{fwd.1} parent=0 // loop_footer_branch
    %16 = sbr.rel target = $region3
  $region8: #{fwd.1} parent=0 // loop_exit
    _

</llo_original>
